<compile_context>
chip_gen: v7x
topology: tpu7x:2x2x1
jax: 0.10.0
libtpu: 0.0.40
codegen_flags: <defaults>
</compile_context>

<pallas_src>
import numpy as np
import jax
import jax.numpy as jnp
from jax import lax
from jax.experimental import pallas as pl
from jax.experimental.pallas import tpu as pltpu

EPS = 1e-5


# --------------------------- host-side weight prep ---------------------------

def bilinear_matrix(n_in, n_out):
    """Interpolation matrix of nn.UpsamplingBilinear2d (align_corners=True)."""
    m = np.zeros((n_out, n_in), np.float32)
    if n_in == 1:
        m[:, 0] = 1.0
        return m
    for o in range(n_out):
        src = o * (n_in - 1) / (n_out - 1)
        i0 = min(int(np.floor(src)), n_in - 1)
        i1 = min(i0 + 1, n_in - 1)
        frac = src - i0
        m[o, i0] += 1.0 - frac
        m[o, i1] += frac
    return m


def fold_bn(w, b, gamma, beta, mean, var):
    """Fold eval-mode BatchNorm2d into the preceding conv (numpy, OIHW)."""
    s = gamma / np.sqrt(var + EPS)
    return w * s[:, None, None, None], (b - mean) * s + beta


def band_fold_taps(w_oihw, cin_lo, cin_hi, W):
    """Per-dh block-tridiagonal (W*Cin, W*Cout) weights.

    The three dw taps (width shifts with zero padding) are folded into the
    weight, so a 3x3 conv over a (H, W*Cin) flattened-lane activation only
    needs 3 matmuls (one per dh)."""
    Cout = w_oihw.shape[0]
    Cin = cin_hi - cin_lo
    out = np.zeros((3, W * Cin, W * Cout), np.float32)
    for dh in range(3):
        for dw in range(3):
            wt = w_oihw[:, cin_lo:cin_hi, dh, dw].T            # (Cin, Cout)
            for w in range(W):
                ws = w + dw - 1
                if 0 <= ws < W:
                    out[dh, ws * Cin:(ws + 1) * Cin,
                        w * Cout:(w + 1) * Cout] += wt
    return out


def upsample_fold_taps(wx, w_oihw, cin_lo, cin_hi, Win, W):
    """Fold the bilinear width-upsample matrix AND the dw taps of conv1's
    upsample half into 3 per-dh (Win*Cin, W*Cout) weights, so the upsampled
    half of the concat never needs to be materialized."""
    Cout = w_oihw.shape[0]
    Cin = cin_hi - cin_lo
    kx = np.kron(wx.T, np.eye(Cin, dtype=np.float32))          # (Win*Cin, W*Cin)
    out = np.zeros((3, Win * Cin, W * Cout), np.float32)
    for dh in range(3):
        for dw in range(3):
            wt = w_oihw[:, cin_lo:cin_hi, dh, dw].T            # (Cin, Cout)
            for w in range(W):
                ws = w + dw - 1
                if 0 <= ws < W:
                    out[dh, :, w * Cout:(w + 1) * Cout] += (
                        kx[:, ws * Cin:(ws + 1) * Cin] @ wt)
    return out


def shifted_wy(wy, H):
    """Height-upsample matrices with the conv dh shift (zero pad) folded in."""
    out = np.zeros((3, H, wy.shape[1]), np.float32)
    for dh in range(3):
        for h in range(H):
            hs = h + dh - 1
            if 0 <= hs < H:
                out[dh, h, :] = wy[hs, :]
    return out


def row_shift_mats(H):
    """sh[0]@a -> a[h-1] (row 0 zero), sh[1] = I, sh[2]@a -> a[h+1] (last zero)."""
    out = np.zeros((3, H, H), np.float32)
    for dh in range(3):
        for h in range(H):
            hs = h + dh - 1
            if 0 <= hs < H:
                out[dh, h, hs] = 1.0
    return out


def init_params(key, num_filters):
    keys = iter(jax.random.split(key, 32))

    def nrm(shape, scale=0.1):
        return np.asarray(jax.random.normal(next(keys), shape, jnp.float32)) * scale

    def conv_bn(cin, cout, k):
        return dict(
            w=nrm((cout, cin, k, k)).astype(np.float32),
            b=nrm((cout,)).astype(np.float32),
            gamma=(1.0 + nrm((cout,))).astype(np.float32),
            beta=nrm((cout,)).astype(np.float32),
            mean=nrm((cout,)).astype(np.float32),
            var=(1.0 + np.abs(nrm((cout,), 0.2))).astype(np.float32),
        )

    return dict(
        conv_bn1=conv_bn(2 * num_filters, num_filters, 3),
        conv_bn2=conv_bn(num_filters, num_filters, 3),
        conv_bn3=conv_bn(num_filters, num_filters, 1),
    )


# ----------------------------- Pallas forward --------------------------------

def decoder_block_branch1_pallas(x_nchw, skip_nchw, params):
    N, F, Hin, Win = x_nchw.shape
    H, W = 2 * Hin, 2 * Win
    WF, WinF = W * F, Win * F
    assert skip_nchw.shape == (N, F, H, W)

    bf16 = jnp.bfloat16
    wy = bilinear_matrix(Hin, H)                              # (H, Hin)
    wx = bilinear_matrix(Win, W)                              # (W, Win)

    p1, p2, p3 = params["conv_bn1"], params["conv_bn2"], params["conv_bn3"]
    w1f, b1f = fold_bn(p1["w"], p1["b"], p1["gamma"], p1["beta"], p1["mean"], p1["var"])
    w2f, b2f = fold_bn(p2["w"], p2["b"], p2["gamma"], p2["beta"], p2["mean"], p2["var"])
    w3f, b3f = fold_bn(p3["w"], p3["b"], p3["gamma"], p3["beta"], p3["mean"], p3["var"])

    sh3 = jnp.asarray(row_shift_mats(H), bf16)                          # (3, H, H)
    wy3 = jnp.asarray(shifted_wy(wy, H), bf16)                          # (3, H, Hin)
    m1b = jnp.asarray(upsample_fold_taps(wx, w1f, F, 2 * F, Win, W), bf16)  # (3, WinF, WF)
    k1a = jnp.asarray(band_fold_taps(w1f, 0, F, W), bf16)               # (3, WF, WF)
    k2 = jnp.asarray(band_fold_taps(w2f, 0, F, W), bf16)                # (3, WF, WF)
    k3 = jnp.asarray(np.kron(np.eye(W, dtype=np.float32),
                             w3f[:, :, 0, 0].T), bf16)                  # (WF, WF)
    b1v = jnp.asarray(np.tile(b1f, W)[None, :], jnp.float32)            # (1, WF)
    b2v = jnp.asarray(np.tile(b2f, W)[None, :], jnp.float32)
    b3v = jnp.asarray(np.tile(b3f, W)[None, :], jnp.float32)

    # NCHW -> channels-last with (W, C) flattened into the lane dim.
    x_flat = jnp.transpose(x_nchw, (0, 2, 3, 1)).reshape(N, Hin, WinF)
    skip_flat = jnp.transpose(skip_nchw, (0, 2, 3, 1)).reshape(N, H, WF)

    def kernel(x_ref, skip_ref, sh3_ref, wy3_ref, m1b_ref, k1a_ref, b1_ref,
               k2_ref, b2_ref, k3_ref, b3_ref, o_ref):
        f32 = jnp.float32

        def conv3x3(a_bf, k_ref):
            # dw taps are pre-folded into k_ref[dh]; the dh (row) shift is a
            # tiny exact 0/1 matmul on the left.  3 MXU matmuls per conv.
            acc = jnp.dot(a_bf, k_ref[1], preferred_element_type=f32)
            for dh in (0, 2):
                a_sh = jnp.dot(sh3_ref[dh], a_bf,
                               preferred_element_type=f32).astype(bf16)
                acc = acc + jnp.dot(a_sh, k_ref[dh], preferred_element_type=f32)
            return acc

        x_bf = x_ref[0].astype(bf16)            # (Hin, WinF)
        skip_bf = skip_ref[0].astype(bf16)      # (H, WF)

        # conv_bn1 over concat(skip, upsample(x)):
        #   skip half    -> block-tridiagonal band matmuls,
        #   upsample half-> bilinear upsample folded into the weights.
        acc1 = conv3x3(skip_bf, k1a_ref)
        for dh in range(3):
            t_dh = jnp.dot(wy3_ref[dh], x_bf,
                           preferred_element_type=f32).astype(bf16)   # (H, WinF)
            acc1 = acc1 + jnp.dot(t_dh, m1b_ref[dh], preferred_element_type=f32)
        x1 = jnp.maximum(acc1 + b1_ref[...], 0.0)

        # conv_bn2 (3x3) + residual + ReLU
        acc2 = conv3x3(x1.astype(bf16), k2_ref)
        x2 = jnp.maximum(acc2 + b2_ref[...] + x1, 0.0)

        # conv_bn3 (1x1) + ReLU
        a3 = jnp.dot(x2.astype(bf16), k3_ref[...], preferred_element_type=f32)
        o_ref[0] = jnp.maximum(a3 + b3_ref[...], 0.0)

    bmap = lambda n: (n, 0, 0)          # per-batch activation blocks
    w3map = lambda n: (0, 0, 0)         # weights: constant -> stay resident
    w2map = lambda n: (0, 0)
    in_specs = [
        pl.BlockSpec((1, Hin, WinF), bmap),     # x
        pl.BlockSpec((1, H, WF), bmap),         # skip (out_block)
        pl.BlockSpec((3, H, H), w3map),         # sh3
        pl.BlockSpec((3, H, Hin), w3map),       # wy3
        pl.BlockSpec((3, WinF, WF), w3map),     # m1b
        pl.BlockSpec((3, WF, WF), w3map),       # k1a
        pl.BlockSpec((1, WF), w2map),           # b1
        pl.BlockSpec((3, WF, WF), w3map),       # k2
        pl.BlockSpec((1, WF), w2map),           # b2
        pl.BlockSpec((WF, WF), w2map),          # k3
        pl.BlockSpec((1, WF), w2map),           # b3
    ]
    out_specs = pl.BlockSpec((1, H, WF), bmap)

    operands = (x_flat, skip_flat, sh3, wy3, m1b, k1a, b1v, k2, b2v, k3, b3v)

    weight_bytes = sum(int(a.size) * a.dtype.itemsize for a in operands[2:])
    block_bytes = 4 * (Hin * WinF + 2 * H * WF)     # x + skip + out blocks, f32
    vmem_limit = int(min(weight_bytes + 4 * block_bytes + (8 << 20), 96 << 20))

    flops_per_batch = 2 * H * (
        (3 + 3 + 1) * WF * WF       # conv1-skip, conv2, conv3 main matmuls
        + 4 * H * WF                # row-shift matmuls
        + 3 * Hin * WinF            # height upsample
        + 3 * WinF * WF)            # folded width-upsample / conv1-upsample half
    bytes_accessed = (sum(int(a.size) * a.dtype.itemsize for a in operands)
                      + N * H * WF * 4)

    out_flat = pl.pallas_call(
        kernel,
        out_shape=jax.ShapeDtypeStruct((N, H, WF), jnp.float32),
        grid_spec=pltpu.PrefetchScalarGridSpec(
            num_scalar_prefetch=0, grid=(N,),
            in_specs=in_specs, out_specs=out_specs),
        compiler_params=pltpu.CompilerParams(
            dimension_semantics=("parallel",),
            vmem_limit_bytes=vmem_limit),
        cost_estimate=pl.CostEstimate(flops=int(N * flops_per_batch),
                                      transcendentals=0,
                                      bytes_accessed=int(bytes_accessed)),
    )(*operands)

    # flattened-lane (N, H, W*C) -> NCHW
    return jnp.transpose(out_flat.reshape(N, H, W, F), (0, 3, 1, 2))


# ----------------------------- pure-JAX reference ----------------------------

def reference_forward(x_nchw, skip_nchw, params):
    N, F, Hin, Win = x_nchw.shape
    H, W = 2 * Hin, 2 * Win
    wy = jnp.asarray(bilinear_matrix(Hin, H))
    wx = jnp.asarray(bilinear_matrix(Win, W))
    t = jnp.einsum('oh,nchw->ncow', wy, x_nchw)
    ups = jnp.einsum('pw,ncow->ncop', wx, t)
    z = jnp.concatenate([skip_nchw, ups], axis=1)

    def conv_bn(z, p, pad):
        w = jnp.asarray(p["w"])
        z = lax.conv_general_dilated(z, w, (1, 1), [(pad, pad), (pad, pad)],
                                     dimension_numbers=('NCHW', 'OIHW', 'NCHW'))
        z = z + jnp.asarray(p["b"])[None, :, None, None]
        g = jnp.asarray(p["gamma"])[None, :, None, None]
        be = jnp.asarray(p["beta"])[None, :, None, None]
        m = jnp.asarray(p["mean"])[None, :, None, None]
        v = jnp.asarray(p["var"])[None, :, None, None]
        return (z - m) / jnp.sqrt(v + EPS) * g + be

    x1 = jax.nn.relu(conv_bn(z, params["conv_bn1"], 1))
    x2 = jax.nn.relu(conv_bn(x1, params["conv_bn2"], 1) + x1)
    x3 = jax.nn.relu(conv_bn(x2, params["conv_bn3"], 0))
    return x3


# ----------------------------------- main ------------------------------------

if __name__ == "__main__":
    num_filters, N, Hin, Win = 8, 2, 8, 8
    key = jax.random.PRNGKey(0)
    kx_, ks_, kp_ = jax.random.split(key, 3)
    x = jax.random.normal(kx_, (N, num_filters, Hin, Win), jnp.float32)
    out_block = jax.random.normal(ks_, (N, num_filters, 2 * Hin, 2 * Win), jnp.float32)
    params = init_params(kp_, num_filters)

    out = jax.block_until_ready(decoder_block_branch1_pallas(x, out_block, params))
    ref = jax.block_until_ready(reference_forward(x, out_block, params))
    assert out.shape == ref.shape == (N, num_filters, 2 * Hin, 2 * Win)
    err = float(jnp.max(jnp.abs(out - ref)))
    scale = float(jnp.max(jnp.abs(ref))) + 1e-6
    # bf16 matmul operands with f32 accumulation -> sub-1% relative error.
    assert err / scale < 2e-2, f"relative error too large: {err / scale} (abs {err})"
    print("KERNEL_OK")
</pallas_src>

<mosaic_0001>
module attributes {stable_mosaic.version = 11 : i64} {
  func.func @kernel(%arg0: i32, %arg1: memref<1x8x64xf32, #tpu.memory_space<vmem>>, %arg2: memref<1x16x128xf32, #tpu.memory_space<vmem>>, %arg3: memref<3x16x16xbf16, #tpu.memory_space<vmem>>, %arg4: memref<3x16x8xbf16, #tpu.memory_space<vmem>>, %arg5: memref<3x64x128xbf16, #tpu.memory_space<vmem>>, %arg6: memref<3x128x128xbf16, #tpu.memory_space<vmem>>, %arg7: memref<1x128xf32, #tpu.memory_space<vmem>>, %arg8: memref<3x128x128xbf16, #tpu.memory_space<vmem>>, %arg9: memref<1x128xf32, #tpu.memory_space<vmem>>, %arg10: memref<128x128xbf16, #tpu.memory_space<vmem>>, %arg11: memref<1x128xf32, #tpu.memory_space<vmem>>, %arg12: memref<1x16x128xf32, #tpu.memory_space<vmem>>) attributes {dimension_semantics = [#tpu.dimension_semantics<parallel>], iteration_bounds = array<i64: 2>, scalar_prefetch = 0 : i64, scratch_operands = 0 : i64, tpu.core_type = #tpu.core_type<tc>, window_params = [{transform_indices = @transform_0, window_bounds = array<i64: 1, 8, 64>}, {transform_indices = @transform_1, window_bounds = array<i64: 1, 16, 128>}, {pipeline_mode = #tpu.pipeline_mode<synchronous>, transform_indices = @transform_2, window_bounds = array<i64: 3, 16, 16>}, {pipeline_mode = #tpu.pipeline_mode<synchronous>, transform_indices = @transform_3, window_bounds = array<i64: 3, 16, 8>}, {pipeline_mode = #tpu.pipeline_mode<synchronous>, transform_indices = @transform_4, window_bounds = array<i64: 3, 64, 128>}, {pipeline_mode = #tpu.pipeline_mode<synchronous>, transform_indices = @transform_5, window_bounds = array<i64: 3, 128, 128>}, {pipeline_mode = #tpu.pipeline_mode<synchronous>, transform_indices = @transform_6, window_bounds = array<i64: 1, 128>}, {pipeline_mode = #tpu.pipeline_mode<synchronous>, transform_indices = @transform_7, window_bounds = array<i64: 3, 128, 128>}, {pipeline_mode = #tpu.pipeline_mode<synchronous>, transform_indices = @transform_8, window_bounds = array<i64: 1, 128>}, {pipeline_mode = #tpu.pipeline_mode<synchronous>, transform_indices = @transform_9, window_bounds = array<i64: 128, 128>}, {pipeline_mode = #tpu.pipeline_mode<synchronous>, transform_indices = @transform_10, window_bounds = array<i64: 1, 128>}, {transform_indices = @transform_11, window_bounds = array<i64: 1, 16, 128>}]} {
    %c0 = arith.constant 0 : index
    %c0_0 = arith.constant 0 : index
    %c0_1 = arith.constant 0 : index
    %0 = vector.load %arg1[%c0, %c0_0, %c0_1] : memref<1x8x64xf32, #tpu.memory_space<vmem>>, vector<1x8x64xf32>
    %1 = vector.shape_cast %0 : vector<1x8x64xf32> to vector<8x64xf32>
    %2 = arith.truncf %1 : vector<8x64xf32> to vector<8x64xbf16>
    %c0_2 = arith.constant 0 : index
    %c0_3 = arith.constant 0 : index
    %c0_4 = arith.constant 0 : index
    %3 = vector.load %arg2[%c0_2, %c0_3, %c0_4] : memref<1x16x128xf32, #tpu.memory_space<vmem>>, vector<1x16x128xf32>
    %4 = vector.shape_cast %3 : vector<1x16x128xf32> to vector<16x128xf32>
    %5 = arith.truncf %4 : vector<16x128xf32> to vector<16x128xbf16>
    %c1 = arith.constant 1 : index
    %c0_5 = arith.constant 0 : index
    %c0_6 = arith.constant 0 : index
    %6 = vector.load %arg6[%c1, %c0_5, %c0_6] : memref<3x128x128xbf16, #tpu.memory_space<vmem>>, vector<1x128x128xbf16>
    %7 = vector.shape_cast %6 : vector<1x128x128xbf16> to vector<128x128xbf16>
    %cst = arith.constant dense<0.000000e+00> : vector<16x128xf32>
    %8 = tpu.matmul %5, %7, %cst {dimension_numbers = #tpu.dot_dimension_numbers<[1], [0], [0], [1], [0, 0, 1, 1], [], []>} : vector<16x128xbf16>, vector<128x128xbf16>, vector<16x128xf32> -> vector<16x128xf32>
    %c0_7 = arith.constant 0 : index
    %c0_8 = arith.constant 0 : index
    %c0_9 = arith.constant 0 : index
    %9 = vector.load %arg3[%c0_7, %c0_8, %c0_9] : memref<3x16x16xbf16, #tpu.memory_space<vmem>>, vector<1x16x16xbf16>
    %10 = vector.shape_cast %9 : vector<1x16x16xbf16> to vector<16x16xbf16>
    %cst_10 = arith.constant dense<0.000000e+00> : vector<16x128xf32>
    %11 = tpu.matmul %10, %5, %cst_10 {dimension_numbers = #tpu.dot_dimension_numbers<[1], [0], [0], [1], [0, 0, 1, 1], [], []>} : vector<16x16xbf16>, vector<16x128xbf16>, vector<16x128xf32> -> vector<16x128xf32>
    %12 = arith.truncf %11 : vector<16x128xf32> to vector<16x128xbf16>
    %c0_11 = arith.constant 0 : index
    %c0_12 = arith.constant 0 : index
    %c0_13 = arith.constant 0 : index
    %13 = vector.load %arg6[%c0_11, %c0_12, %c0_13] : memref<3x128x128xbf16, #tpu.memory_space<vmem>>, vector<1x128x128xbf16>
    %14 = vector.shape_cast %13 : vector<1x128x128xbf16> to vector<128x128xbf16>
    %cst_14 = arith.constant dense<0.000000e+00> : vector<16x128xf32>
    %15 = tpu.matmul %12, %14, %cst_14 {dimension_numbers = #tpu.dot_dimension_numbers<[1], [0], [0], [1], [0, 0, 1, 1], [], []>} : vector<16x128xbf16>, vector<128x128xbf16>, vector<16x128xf32> -> vector<16x128xf32>
    %16 = arith.addf %8, %15 : vector<16x128xf32>
    %c2 = arith.constant 2 : index
    %c0_15 = arith.constant 0 : index
    %c0_16 = arith.constant 0 : index
    %17 = vector.load %arg3[%c2, %c0_15, %c0_16] : memref<3x16x16xbf16, #tpu.memory_space<vmem>>, vector<1x16x16xbf16>
    %18 = vector.shape_cast %17 : vector<1x16x16xbf16> to vector<16x16xbf16>
    %cst_17 = arith.constant dense<0.000000e+00> : vector<16x128xf32>
    %19 = tpu.matmul %18, %5, %cst_17 {dimension_numbers = #tpu.dot_dimension_numbers<[1], [0], [0], [1], [0, 0, 1, 1], [], []>} : vector<16x16xbf16>, vector<16x128xbf16>, vector<16x128xf32> -> vector<16x128xf32>
    %20 = arith.truncf %19 : vector<16x128xf32> to vector<16x128xbf16>
    %c2_18 = arith.constant 2 : index
    %c0_19 = arith.constant 0 : index
    %c0_20 = arith.constant 0 : index
    %21 = vector.load %arg6[%c2_18, %c0_19, %c0_20] : memref<3x128x128xbf16, #tpu.memory_space<vmem>>, vector<1x128x128xbf16>
    %22 = vector.shape_cast %21 : vector<1x128x128xbf16> to vector<128x128xbf16>
    %cst_21 = arith.constant dense<0.000000e+00> : vector<16x128xf32>
    %23 = tpu.matmul %20, %22, %cst_21 {dimension_numbers = #tpu.dot_dimension_numbers<[1], [0], [0], [1], [0, 0, 1, 1], [], []>} : vector<16x128xbf16>, vector<128x128xbf16>, vector<16x128xf32> -> vector<16x128xf32>
    %24 = arith.addf %16, %23 : vector<16x128xf32>
    %c0_22 = arith.constant 0 : index
    %c0_23 = arith.constant 0 : index
    %c0_24 = arith.constant 0 : index
    %25 = vector.load %arg4[%c0_22, %c0_23, %c0_24] : memref<3x16x8xbf16, #tpu.memory_space<vmem>>, vector<1x16x8xbf16>
    %26 = vector.shape_cast %25 : vector<1x16x8xbf16> to vector<16x8xbf16>
    %cst_25 = arith.constant dense<0.000000e+00> : vector<16x64xf32>
    %27 = tpu.matmul %26, %2, %cst_25 {dimension_numbers = #tpu.dot_dimension_numbers<[1], [0], [0], [1], [0, 0, 1, 1], [], []>} : vector<16x8xbf16>, vector<8x64xbf16>, vector<16x64xf32> -> vector<16x64xf32>
    %28 = arith.truncf %27 : vector<16x64xf32> to vector<16x64xbf16>
    %c0_26 = arith.constant 0 : index
    %c0_27 = arith.constant 0 : index
    %c0_28 = arith.constant 0 : index
    %29 = vector.load %arg5[%c0_26, %c0_27, %c0_28] : memref<3x64x128xbf16, #tpu.memory_space<vmem>>, vector<1x64x128xbf16>
    %30 = vector.shape_cast %29 : vector<1x64x128xbf16> to vector<64x128xbf16>
    %cst_29 = arith.constant dense<0.000000e+00> : vector<16x128xf32>
    %31 = tpu.matmul %28, %30, %cst_29 {dimension_numbers = #tpu.dot_dimension_numbers<[1], [0], [0], [1], [0, 0, 1, 1], [], []>} : vector<16x64xbf16>, vector<64x128xbf16>, vector<16x128xf32> -> vector<16x128xf32>
    %32 = arith.addf %24, %31 : vector<16x128xf32>
    %c1_30 = arith.constant 1 : index
    %c0_31 = arith.constant 0 : index
    %c0_32 = arith.constant 0 : index
    %33 = vector.load %arg4[%c1_30, %c0_31, %c0_32] : memref<3x16x8xbf16, #tpu.memory_space<vmem>>, vector<1x16x8xbf16>
    %34 = vector.shape_cast %33 : vector<1x16x8xbf16> to vector<16x8xbf16>
    %cst_33 = arith.constant dense<0.000000e+00> : vector<16x64xf32>
    %35 = tpu.matmul %34, %2, %cst_33 {dimension_numbers = #tpu.dot_dimension_numbers<[1], [0], [0], [1], [0, 0, 1, 1], [], []>} : vector<16x8xbf16>, vector<8x64xbf16>, vector<16x64xf32> -> vector<16x64xf32>
    %36 = arith.truncf %35 : vector<16x64xf32> to vector<16x64xbf16>
    %c1_34 = arith.constant 1 : index
    %c0_35 = arith.constant 0 : index
    %c0_36 = arith.constant 0 : index
    %37 = vector.load %arg5[%c1_34, %c0_35, %c0_36] : memref<3x64x128xbf16, #tpu.memory_space<vmem>>, vector<1x64x128xbf16>
    %38 = vector.shape_cast %37 : vector<1x64x128xbf16> to vector<64x128xbf16>
    %cst_37 = arith.constant dense<0.000000e+00> : vector<16x128xf32>
    %39 = tpu.matmul %36, %38, %cst_37 {dimension_numbers = #tpu.dot_dimension_numbers<[1], [0], [0], [1], [0, 0, 1, 1], [], []>} : vector<16x64xbf16>, vector<64x128xbf16>, vector<16x128xf32> -> vector<16x128xf32>
    %40 = arith.addf %32, %39 : vector<16x128xf32>
    %c2_38 = arith.constant 2 : index
    %c0_39 = arith.constant 0 : index
    %c0_40 = arith.constant 0 : index
    %41 = vector.load %arg4[%c2_38, %c0_39, %c0_40] : memref<3x16x8xbf16, #tpu.memory_space<vmem>>, vector<1x16x8xbf16>
    %42 = vector.shape_cast %41 : vector<1x16x8xbf16> to vector<16x8xbf16>
    %cst_41 = arith.constant dense<0.000000e+00> : vector<16x64xf32>
    %43 = tpu.matmul %42, %2, %cst_41 {dimension_numbers = #tpu.dot_dimension_numbers<[1], [0], [0], [1], [0, 0, 1, 1], [], []>} : vector<16x8xbf16>, vector<8x64xbf16>, vector<16x64xf32> -> vector<16x64xf32>
    %44 = arith.truncf %43 : vector<16x64xf32> to vector<16x64xbf16>
    %c2_42 = arith.constant 2 : index
    %c0_43 = arith.constant 0 : index
    %c0_44 = arith.constant 0 : index
    %45 = vector.load %arg5[%c2_42, %c0_43, %c0_44] : memref<3x64x128xbf16, #tpu.memory_space<vmem>>, vector<1x64x128xbf16>
    %46 = vector.shape_cast %45 : vector<1x64x128xbf16> to vector<64x128xbf16>
    %cst_45 = arith.constant dense<0.000000e+00> : vector<16x128xf32>
    %47 = tpu.matmul %44, %46, %cst_45 {dimension_numbers = #tpu.dot_dimension_numbers<[1], [0], [0], [1], [0, 0, 1, 1], [], []>} : vector<16x64xbf16>, vector<64x128xbf16>, vector<16x128xf32> -> vector<16x128xf32>
    %48 = arith.addf %40, %47 : vector<16x128xf32>
    %c0_46 = arith.constant 0 : index
    %c0_47 = arith.constant 0 : index
    %49 = vector.load %arg7[%c0_46, %c0_47] : memref<1x128xf32, #tpu.memory_space<vmem>>, vector<1x128xf32>
    %50 = vector.broadcast %49 : vector<1x128xf32> to vector<16x128xf32>
    %51 = arith.addf %48, %50 : vector<16x128xf32>
    %cst_48 = arith.constant 0.000000e+00 : f32
    %52 = vector.broadcast %cst_48 : f32 to vector<16x128xf32>
    %53 = arith.maximumf %51, %52 : vector<16x128xf32>
    %54 = arith.truncf %53 : vector<16x128xf32> to vector<16x128xbf16>
    %c1_49 = arith.constant 1 : index
    %c0_50 = arith.constant 0 : index
    %c0_51 = arith.constant 0 : index
    %55 = vector.load %arg8[%c1_49, %c0_50, %c0_51] : memref<3x128x128xbf16, #tpu.memory_space<vmem>>, vector<1x128x128xbf16>
    %56 = vector.shape_cast %55 : vector<1x128x128xbf16> to vector<128x128xbf16>
    %cst_52 = arith.constant dense<0.000000e+00> : vector<16x128xf32>
    %57 = tpu.matmul %54, %56, %cst_52 {dimension_numbers = #tpu.dot_dimension_numbers<[1], [0], [0], [1], [0, 0, 1, 1], [], []>} : vector<16x128xbf16>, vector<128x128xbf16>, vector<16x128xf32> -> vector<16x128xf32>
    %c0_53 = arith.constant 0 : index
    %c0_54 = arith.constant 0 : index
    %c0_55 = arith.constant 0 : index
    %58 = vector.load %arg3[%c0_53, %c0_54, %c0_55] : memref<3x16x16xbf16, #tpu.memory_space<vmem>>, vector<1x16x16xbf16>
    %59 = vector.shape_cast %58 : vector<1x16x16xbf16> to vector<16x16xbf16>
    %cst_56 = arith.constant dense<0.000000e+00> : vector<16x128xf32>
    %60 = tpu.matmul %59, %54, %cst_56 {dimension_numbers = #tpu.dot_dimension_numbers<[1], [0], [0], [1], [0, 0, 1, 1], [], []>} : vector<16x16xbf16>, vector<16x128xbf16>, vector<16x128xf32> -> vector<16x128xf32>
    %61 = arith.truncf %60 : vector<16x128xf32> to vector<16x128xbf16>
    %c0_57 = arith.constant 0 : index
    %c0_58 = arith.constant 0 : index
    %c0_59 = arith.constant 0 : index
    %62 = vector.load %arg8[%c0_57, %c0_58, %c0_59] : memref<3x128x128xbf16, #tpu.memory_space<vmem>>, vector<1x128x128xbf16>
    %63 = vector.shape_cast %62 : vector<1x128x128xbf16> to vector<128x128xbf16>
    %cst_60 = arith.constant dense<0.000000e+00> : vector<16x128xf32>
    %64 = tpu.matmul %61, %63, %cst_60 {dimension_numbers = #tpu.dot_dimension_numbers<[1], [0], [0], [1], [0, 0, 1, 1], [], []>} : vector<16x128xbf16>, vector<128x128xbf16>, vector<16x128xf32> -> vector<16x128xf32>
    %65 = arith.addf %57, %64 : vector<16x128xf32>
    %c2_61 = arith.constant 2 : index
    %c0_62 = arith.constant 0 : index
    %c0_63 = arith.constant 0 : index
    %66 = vector.load %arg3[%c2_61, %c0_62, %c0_63] : memref<3x16x16xbf16, #tpu.memory_space<vmem>>, vector<1x16x16xbf16>
    %67 = vector.shape_cast %66 : vector<1x16x16xbf16> to vector<16x16xbf16>
    %cst_64 = arith.constant dense<0.000000e+00> : vector<16x128xf32>
    %68 = tpu.matmul %67, %54, %cst_64 {dimension_numbers = #tpu.dot_dimension_numbers<[1], [0], [0], [1], [0, 0, 1, 1], [], []>} : vector<16x16xbf16>, vector<16x128xbf16>, vector<16x128xf32> -> vector<16x128xf32>
    %69 = arith.truncf %68 : vector<16x128xf32> to vector<16x128xbf16>
    %c2_65 = arith.constant 2 : index
    %c0_66 = arith.constant 0 : index
    %c0_67 = arith.constant 0 : index
    %70 = vector.load %arg8[%c2_65, %c0_66, %c0_67] : memref<3x128x128xbf16, #tpu.memory_space<vmem>>, vector<1x128x128xbf16>
    %71 = vector.shape_cast %70 : vector<1x128x128xbf16> to vector<128x128xbf16>
    %cst_68 = arith.constant dense<0.000000e+00> : vector<16x128xf32>
    %72 = tpu.matmul %69, %71, %cst_68 {dimension_numbers = #tpu.dot_dimension_numbers<[1], [0], [0], [1], [0, 0, 1, 1], [], []>} : vector<16x128xbf16>, vector<128x128xbf16>, vector<16x128xf32> -> vector<16x128xf32>
    %73 = arith.addf %65, %72 : vector<16x128xf32>
    %c0_69 = arith.constant 0 : index
    %c0_70 = arith.constant 0 : index
    %74 = vector.load %arg9[%c0_69, %c0_70] : memref<1x128xf32, #tpu.memory_space<vmem>>, vector<1x128xf32>
    %75 = vector.broadcast %74 : vector<1x128xf32> to vector<16x128xf32>
    %76 = arith.addf %73, %75 : vector<16x128xf32>
    %77 = arith.addf %76, %53 : vector<16x128xf32>
    %cst_71 = arith.constant 0.000000e+00 : f32
    %78 = vector.broadcast %cst_71 : f32 to vector<16x128xf32>
    %79 = arith.maximumf %77, %78 : vector<16x128xf32>
    %80 = arith.truncf %79 : vector<16x128xf32> to vector<16x128xbf16>
    %c0_72 = arith.constant 0 : index
    %c0_73 = arith.constant 0 : index
    %81 = vector.load %arg10[%c0_72, %c0_73] : memref<128x128xbf16, #tpu.memory_space<vmem>>, vector<128x128xbf16>
    %cst_74 = arith.constant dense<0.000000e+00> : vector<16x128xf32>
    %82 = tpu.matmul %80, %81, %cst_74 {dimension_numbers = #tpu.dot_dimension_numbers<[1], [0], [0], [1], [0, 0, 1, 1], [], []>} : vector<16x128xbf16>, vector<128x128xbf16>, vector<16x128xf32> -> vector<16x128xf32>
    %c0_75 = arith.constant 0 : index
    %c0_76 = arith.constant 0 : index
    %83 = vector.load %arg11[%c0_75, %c0_76] : memref<1x128xf32, #tpu.memory_space<vmem>>, vector<1x128xf32>
    %84 = vector.broadcast %83 : vector<1x128xf32> to vector<16x128xf32>
    %85 = arith.addf %82, %84 : vector<16x128xf32>
    %cst_77 = arith.constant 0.000000e+00 : f32
    %86 = vector.broadcast %cst_77 : f32 to vector<16x128xf32>
    %87 = arith.maximumf %85, %86 : vector<16x128xf32>
    %c0_78 = arith.constant 0 : index
    %c0_79 = arith.constant 0 : index
    %c0_80 = arith.constant 0 : index
    %88 = vector.load %arg12[%c0_78, %c0_79, %c0_80] : memref<1x16x128xf32, #tpu.memory_space<vmem>>, vector<1x16x128xf32>
    %89 = vector.shape_cast %88 : vector<1x16x128xf32> to vector<16x128xf32>
    %90 = vector.shape_cast %87 : vector<16x128xf32> to vector<1x16x128xf32>
    tpu.vector_store %arg12[%c0_78, %c0_79, %c0_80], %90 {strides = array<i32>} : memref<1x16x128xf32, #tpu.memory_space<vmem>>, vector<1x16x128xf32>,
    return
  }
  func.func @transform_0(%arg0: i32) -> (i32, i32, i32) {
    %c0_i32 = arith.constant 0 : i32
    %c0_i32_0 = arith.constant 0 : i32
    %c0_i32_1 = arith.constant 0 : i32
    return %arg0, %c0_i32, %c0_i32_0 : i32, i32, i32
  }
  func.func @transform_1(%arg0: i32) -> (i32, i32, i32) {
    %c0_i32 = arith.constant 0 : i32
    %c0_i32_0 = arith.constant 0 : i32
    %c0_i32_1 = arith.constant 0 : i32
    return %arg0, %c0_i32, %c0_i32_0 : i32, i32, i32
  }
  func.func @transform_2(%arg0: i32) -> (i32, i32, i32) {
    %c0_i32 = arith.constant 0 : i32
    %c0_i32_0 = arith.constant 0 : i32
    %c0_i32_1 = arith.constant 0 : i32
    %c0_i32_2 = arith.constant 0 : i32
    return %c0_i32, %c0_i32_0, %c0_i32_1 : i32, i32, i32
  }
  func.func @transform_3(%arg0: i32) -> (i32, i32, i32) {
    %c0_i32 = arith.constant 0 : i32
    %c0_i32_0 = arith.constant 0 : i32
    %c0_i32_1 = arith.constant 0 : i32
    %c0_i32_2 = arith.constant 0 : i32
    return %c0_i32, %c0_i32_0, %c0_i32_1 : i32, i32, i32
  }
  func.func @transform_4(%arg0: i32) -> (i32, i32, i32) {
    %c0_i32 = arith.constant 0 : i32
    %c0_i32_0 = arith.constant 0 : i32
    %c0_i32_1 = arith.constant 0 : i32
    %c0_i32_2 = arith.constant 0 : i32
    return %c0_i32, %c0_i32_0, %c0_i32_1 : i32, i32, i32
  }
  func.func @transform_5(%arg0: i32) -> (i32, i32, i32) {
    %c0_i32 = arith.constant 0 : i32
    %c0_i32_0 = arith.constant 0 : i32
    %c0_i32_1 = arith.constant 0 : i32
    %c0_i32_2 = arith.constant 0 : i32
    return %c0_i32, %c0_i32_0, %c0_i32_1 : i32, i32, i32
  }
  func.func @transform_6(%arg0: i32) -> (i32, i32) {
    %c0_i32 = arith.constant 0 : i32
    %c0_i32_0 = arith.constant 0 : i32
    %c0_i32_1 = arith.constant 0 : i32
    return %c0_i32, %c0_i32_0 : i32, i32
  }
  func.func @transform_7(%arg0: i32) -> (i32, i32, i32) {
    %c0_i32 = arith.constant 0 : i32
    %c0_i32_0 = arith.constant 0 : i32
    %c0_i32_1 = arith.constant 0 : i32
    %c0_i32_2 = arith.constant 0 : i32
    return %c0_i32, %c0_i32_0, %c0_i32_1 : i32, i32, i32
  }
  func.func @transform_8(%arg0: i32) -> (i32, i32) {
    %c0_i32 = arith.constant 0 : i32
    %c0_i32_0 = arith.constant 0 : i32
    %c0_i32_1 = arith.constant 0 : i32
    return %c0_i32, %c0_i32_0 : i32, i32
  }
  func.func @transform_9(%arg0: i32) -> (i32, i32) {
    %c0_i32 = arith.constant 0 : i32
    %c0_i32_0 = arith.constant 0 : i32
    %c0_i32_1 = arith.constant 0 : i32
    return %c0_i32, %c0_i32_0 : i32, i32
  }
  func.func @transform_10(%arg0: i32) -> (i32, i32) {
    %c0_i32 = arith.constant 0 : i32
    %c0_i32_0 = arith.constant 0 : i32
    %c0_i32_1 = arith.constant 0 : i32
    return %c0_i32, %c0_i32_0 : i32, i32
  }
  func.func @transform_11(%arg0: i32) -> (i32, i32, i32) {
    %c0_i32 = arith.constant 0 : i32
    %c0_i32_0 = arith.constant 0 : i32
    %c0_i32_1 = arith.constant 0 : i32
    return %arg0, %c0_i32, %c0_i32_0 : i32, i32, i32
  }
}

</mosaic_0001>

<llo_original>
// kernel: tpu_custom_call.1
$region0: #{tpu_custom_call.1}
  #allocation0 [shape = 'u32[]', space=smem, size = 0x4, offset = 0x4, fixed_abs, tag = 'smem constant byte address 0x4 - core index']
  #allocation1 [shape = 'u32[144,128]{1,0:T(1,128)}', space=vmem, size = 0x12000, scoped, tag = 'internal scratch']
  %s0 = inlined_call_operand.hbm [shape: f32[2,8,64], index: 0, kind: input, shape index: {}]
  %s1 = inlined_call_operand.hbm [shape: f32[2,16,128], index: 1, kind: input, shape index: {}]
  %s2 = inlined_call_operand.hbm [shape: bf16[3,16,16], index: 2, kind: input, shape index: {}]
  %s3 = inlined_call_operand.vmem [shape: bf16[3,16,8], index: 3, kind: input, shape index: {}]
  %s4 = inlined_call_operand.hbm [shape: bf16[3,64,128], index: 4, kind: input, shape index: {}]
  %s5 = inlined_call_operand.hbm [shape: bf16[3,128,128], index: 5, kind: input, shape index: {}]
  %s6 = inlined_call_operand.vmem [shape: f32[1,128], index: 6, kind: input, shape index: {}]
  %s7 = inlined_call_operand.hbm [shape: bf16[3,128,128], index: 7, kind: input, shape index: {}]
  %s8 = inlined_call_operand.vmem [shape: f32[1,128], index: 8, kind: input, shape index: {}]
  %s9 = inlined_call_operand.vmem [shape: bf16[128,128], index: 9, kind: input, shape index: {}]
  %s10 = inlined_call_operand.vmem [shape: f32[1,128], index: 10, kind: input, shape index: {}]
  %s11 = inlined_call_operand.hbm [shape: f32[2,16,128], index: 11, kind: output, shape index: {}]
  %s12 = sld [smem:[#allocation0]]
  $region101: #{tpu_custom_call.1} parent=0
    _
  %s14 = ssub.s32 1, %s12
  %s15 = scalar_select 0, %s14, %s12
  $region1: #{tpu_custom_call.1} parent=0
    #allocation2 [shape = 'u8[8192]{0}', space=vmem, size = 0x2000, scoped, tag = 'input window, operand 0']
    #allocation3 [shape = 's32[2]{0}', space=sflag, size = 0x8, scoped, tag = 'scoped memory for tpu_custom_call.1']
    #allocation4 [shape = 's32[2]{0}', space=sflag, size = 0x8, scoped, tag = 'scoped memory for tpu_custom_call.1']
    #allocation5 [shape = 'u8[16384]{0}', space=vmem, size = 0x4000, scoped, tag = 'input window, operand 1']
    #allocation6 [shape = 's32[2]{0}', space=sflag, size = 0x8, scoped, tag = 'scoped memory for tpu_custom_call.1']
    #allocation7 [shape = 'u8[12288]{0}', space=vmem, size = 0x3000, scoped, tag = 'input window, operand 2, single buffered']
    #allocation8 [shape = 'u8[49152]{0}', space=vmem, size = 0xc000, scoped, tag = 'input window, operand 4, single buffered']
    #allocation9 [shape = 's32[1]{0}', space=sflag, size = 0x4, scoped, tag = 'scoped memory for tpu_custom_call.1']
    #allocation10 [shape = 'u8[98304]{0}', space=vmem, size = 0x18000, scoped, tag = 'input window, operand 5, single buffered']
    #allocation11 [shape = 'u8[98304]{0}', space=vmem, size = 0x18000, scoped, tag = 'input window, operand 7, single buffered']
    #allocation12 [shape = 's32[1]{0}', space=sflag, size = 0x4, scoped, tag = 'scoped memory for tpu_custom_call.1']
    #allocation13 [shape = 'u8[16384]{0}', space=vmem, size = 0x4000, scoped, tag = 'output window, operand 0']
    %16 = vsyncpa [#allocation3], 0
    %s17 = scalar_lea.sflag [#allocation3], 1
    %18 = vsyncpa %s17, 0
    %19 = vsyncpa [#allocation6], 0
    %s20 = scalar_lea.sflag [#allocation6], 1
    %21 = vsyncpa %s20, 0
    %22 = vsyncpa [#allocation9], 0
    %23 = vsyncpa [#allocation12], 0
    %24 = vsyncpa [#allocation4], 0
    %s25 = scalar_lea.sflag [#allocation4], 1
    %26 = vsyncpa %s25, 0
    loop: start=0, step=1, limit=4
    $region2: #{tpu_custom_call.1} parent=1 // loop_pre_header
      _
    $region3: #{tpu_custom_call.1} parent=1 // loop_header
      %s28 = sphi 0, %s32
      %p29 = scmp.ge.s32.totalorder %s28, 4
      %s38 = sphi 0, %s40
      %s41 = sphi 0, %s38
      %s42 = sphi 0, %s41
      %s58 = sphi 0, %s42
      %s64 = sphi 0, %s66
      %s67 = sphi 0, %s64
      %s68 = sphi 0, %s67
      %s84 = sphi 0, %s68
      %s88 = sphi 0, %s88
      %s90 = sphi 0, %s88
      %s91 = sphi 0, %s90
      %s105 = sphi 0, %s91
      %s109 = sphi 0, %s109
      %s111 = sphi 0, %s109
      %s112 = sphi 0, %s111
      %s126 = sphi 0, %s112
      %s130 = sphi 0, %s130
      %s132 = sphi 0, %s130
      %s133 = sphi 0, %s132
      %s147 = sphi 0, %s133
      %s151 = sphi 0, %s151
      %s153 = sphi 0, %s151
      %s154 = sphi 0, %s153
      %s168 = sphi 0, %s154
      %s172 = sphi 0, %s172
      %s174 = sphi 0, %s172
      %s175 = sphi 0, %s174
      %s189 = sphi 0, %s175
      %s193 = sphi 0, %s193
      %s195 = sphi 0, %s193
      %s196 = sphi 0, %s195
      %s210 = sphi 0, %s196
      %s214 = sphi 0, %s214
      %s216 = sphi 0, %s214
      %s217 = sphi 0, %s216
      %s231 = sphi 0, %s217
      %s235 = sphi 0, %s235
      %s237 = sphi 0, %s235
      %s238 = sphi 0, %s237
      %s252 = sphi 0, %s238
      %s256 = sphi 0, %s256
      %s258 = sphi 0, %s256
      %s259 = sphi 0, %s258
      %s273 = sphi 0, %s259
      %s279 = sphi 0, %s281
      %s282 = sphi 0, %s279
      %s283 = sphi 0, %s282
      %s299 = sphi 0, %s283
    $region4: #{tpu_custom_call.1} parent=1 // loop_header_branch
      %31 = sbr.rel (%p29) target = $region8
    $region5: #{tpu_custom_call.1} parent=1 // loop_body
      %s33 = ssub.s32 %s28, 1
      %s34 = ssub.s32 %s28, 2
      %s35 = sadd.s32 %s28, 1
      %s36 = ssub.s32 %s28, %s35
      %p37 = scmp.eq.s32.totalorder %s36, 0
      %s39 = sadd.s32 %s38, 1
      %s40 = scalar_select %p37, %s38, %s39
      %p43 = pneg %p37
      %p44 = scmp.eq.s32.totalorder %s28, 1
      %p45 = por %p43, %p44
      %p46 = scmp.ne.s32.totalorder %s38, %s41
      %p47 = scmp.eq.s32.totalorder %s28, 0
      %p48 = por %p46, %p47
      %p49 = scmp.ne.s32.totalorder %s38, %s41
      %p50 = scmp.eq.s32.totalorder %s33, 1
      %p51 = por %p49, %p50
      %p52 = scmp.ne.s32.totalorder %s41, %s42
      %p53 = scmp.eq.s32.totalorder %s33, 0
      %p54 = por %p52, %p53
      %p55 = scmp.ne.s32.totalorder %s41, %s42
      %p56 = scmp.eq.s32.totalorder %s34, 1
      %p57 = por %p55, %p56
      %p59 = scmp.ne.s32.totalorder %s42, %s58
      %p60 = scmp.eq.s32.totalorder %s34, 0
      %p61 = por %p59, %p60
      %s62 = ssub.s32 %s28, %s35
      %p63 = scmp.eq.s32.totalorder %s62, 0
      %s65 = sadd.s32 %s64, 1
      %s66 = scalar_select %p63, %s64, %s65
      %p69 = pneg %p63
      %p70 = scmp.eq.s32.totalorder %s28, 1
      %p71 = por %p69, %p70
      %p72 = scmp.ne.s32.totalorder %s64, %s67
      %p73 = scmp.eq.s32.totalorder %s28, 0
      %p74 = por %p72, %p73
      %p75 = scmp.ne.s32.totalorder %s64, %s67
      %p76 = scmp.eq.s32.totalorder %s33, 1
      %p77 = por %p75, %p76
      %p78 = scmp.ne.s32.totalorder %s67, %s68
      %p79 = scmp.eq.s32.totalorder %s33, 0
      %p80 = por %p78, %p79
      %p81 = scmp.ne.s32.totalorder %s67, %s68
      %p82 = scmp.eq.s32.totalorder %s34, 1
      %p83 = por %p81, %p82
      %p85 = scmp.ne.s32.totalorder %s68, %s84
      %p86 = scmp.eq.s32.totalorder %s34, 0
      %p87 = por %p85, %p86
      %s89 = sadd.s32 %s88, 1
      %p92 = scmp.eq.s32.totalorder %s28, 1
      %p93 = scmp.ne.s32.totalorder %s88, %s90
      %p94 = scmp.eq.s32.totalorder %s28, 0
      %p95 = por %p93, %p94
      %p96 = scmp.ne.s32.totalorder %s88, %s90
      %p97 = scmp.eq.s32.totalorder %s33, 1
      %p98 = por %p96, %p97
      %p99 = scmp.ne.s32.totalorder %s90, %s91
      %p100 = scmp.eq.s32.totalorder %s33, 0
      %p101 = por %p99, %p100
      %p102 = scmp.ne.s32.totalorder %s90, %s91
      %p103 = scmp.eq.s32.totalorder %s34, 1
      %p104 = por %p102, %p103
      %p106 = scmp.ne.s32.totalorder %s91, %s105
      %p107 = scmp.eq.s32.totalorder %s34, 0
      %p108 = por %p106, %p107
      %s110 = sadd.s32 %s109, 1
      %p113 = scmp.eq.s32.totalorder %s28, 1
      %p114 = scmp.ne.s32.totalorder %s109, %s111
      %p115 = scmp.eq.s32.totalorder %s28, 0
      %p116 = por %p114, %p115
      %p117 = scmp.ne.s32.totalorder %s109, %s111
      %p118 = scmp.eq.s32.totalorder %s33, 1
      %p119 = por %p117, %p118
      %p120 = scmp.ne.s32.totalorder %s111, %s112
      %p121 = scmp.eq.s32.totalorder %s33, 0
      %p122 = por %p120, %p121
      %p123 = scmp.ne.s32.totalorder %s111, %s112
      %p124 = scmp.eq.s32.totalorder %s34, 1
      %p125 = por %p123, %p124
      %p127 = scmp.ne.s32.totalorder %s112, %s126
      %p128 = scmp.eq.s32.totalorder %s34, 0
      %p129 = por %p127, %p128
      %s131 = sadd.s32 %s130, 1
      %p134 = scmp.eq.s32.totalorder %s28, 1
      %p135 = scmp.ne.s32.totalorder %s130, %s132
      %p136 = scmp.eq.s32.totalorder %s28, 0
      %p137 = por %p135, %p136
      %p138 = scmp.ne.s32.totalorder %s130, %s132
      %p139 = scmp.eq.s32.totalorder %s33, 1
      %p140 = por %p138, %p139
      %p141 = scmp.ne.s32.totalorder %s132, %s133
      %p142 = scmp.eq.s32.totalorder %s33, 0
      %p143 = por %p141, %p142
      %p144 = scmp.ne.s32.totalorder %s132, %s133
      %p145 = scmp.eq.s32.totalorder %s34, 1
      %p146 = por %p144, %p145
      %p148 = scmp.ne.s32.totalorder %s133, %s147
      %p149 = scmp.eq.s32.totalorder %s34, 0
      %p150 = por %p148, %p149
      %s152 = sadd.s32 %s151, 1
      %p155 = scmp.eq.s32.totalorder %s28, 1
      %p156 = scmp.ne.s32.totalorder %s151, %s153
      %p157 = scmp.eq.s32.totalorder %s28, 0
      %p158 = por %p156, %p157
      %p159 = scmp.ne.s32.totalorder %s151, %s153
      %p160 = scmp.eq.s32.totalorder %s33, 1
      %p161 = por %p159, %p160
      %p162 = scmp.ne.s32.totalorder %s153, %s154
      %p163 = scmp.eq.s32.totalorder %s33, 0
      %p164 = por %p162, %p163
      %p165 = scmp.ne.s32.totalorder %s153, %s154
      %p166 = scmp.eq.s32.totalorder %s34, 1
      %p167 = por %p165, %p166
      %p169 = scmp.ne.s32.totalorder %s154, %s168
      %p170 = scmp.eq.s32.totalorder %s34, 0
      %p171 = por %p169, %p170
      %s173 = sadd.s32 %s172, 1
      %p176 = scmp.eq.s32.totalorder %s28, 1
      %p177 = scmp.ne.s32.totalorder %s172, %s174
      %p178 = scmp.eq.s32.totalorder %s28, 0
      %p179 = por %p177, %p178
      %p180 = scmp.ne.s32.totalorder %s172, %s174
      %p181 = scmp.eq.s32.totalorder %s33, 1
      %p182 = por %p180, %p181
      %p183 = scmp.ne.s32.totalorder %s174, %s175
      %p184 = scmp.eq.s32.totalorder %s33, 0
      %p185 = por %p183, %p184
      %p186 = scmp.ne.s32.totalorder %s174, %s175
      %p187 = scmp.eq.s32.totalorder %s34, 1
      %p188 = por %p186, %p187
      %p190 = scmp.ne.s32.totalorder %s175, %s189
      %p191 = scmp.eq.s32.totalorder %s34, 0
      %p192 = por %p190, %p191
      %s194 = sadd.s32 %s193, 1
      %p197 = scmp.eq.s32.totalorder %s28, 1
      %p198 = scmp.ne.s32.totalorder %s193, %s195
      %p199 = scmp.eq.s32.totalorder %s28, 0
      %p200 = por %p198, %p199
      %p201 = scmp.ne.s32.totalorder %s193, %s195
      %p202 = scmp.eq.s32.totalorder %s33, 1
      %p203 = por %p201, %p202
      %p204 = scmp.ne.s32.totalorder %s195, %s196
      %p205 = scmp.eq.s32.totalorder %s33, 0
      %p206 = por %p204, %p205
      %p207 = scmp.ne.s32.totalorder %s195, %s196
      %p208 = scmp.eq.s32.totalorder %s34, 1
      %p209 = por %p207, %p208
      %p211 = scmp.ne.s32.totalorder %s196, %s210
      %p212 = scmp.eq.s32.totalorder %s34, 0
      %p213 = por %p211, %p212
      %s215 = sadd.s32 %s214, 1
      %p218 = scmp.eq.s32.totalorder %s28, 1
      %p219 = scmp.ne.s32.totalorder %s214, %s216
      %p220 = scmp.eq.s32.totalorder %s28, 0
      %p221 = por %p219, %p220
      %p222 = scmp.ne.s32.totalorder %s214, %s216
      %p223 = scmp.eq.s32.totalorder %s33, 1
      %p224 = por %p222, %p223
      %p225 = scmp.ne.s32.totalorder %s216, %s217
      %p226 = scmp.eq.s32.totalorder %s33, 0
      %p227 = por %p225, %p226
      %p228 = scmp.ne.s32.totalorder %s216, %s217
      %p229 = scmp.eq.s32.totalorder %s34, 1
      %p230 = por %p228, %p229
      %p232 = scmp.ne.s32.totalorder %s217, %s231
      %p233 = scmp.eq.s32.totalorder %s34, 0
      %p234 = por %p232, %p233
      %s236 = sadd.s32 %s235, 1
      %p239 = scmp.eq.s32.totalorder %s28, 1
      %p240 = scmp.ne.s32.totalorder %s235, %s237
      %p241 = scmp.eq.s32.totalorder %s28, 0
      %p242 = por %p240, %p241
      %p243 = scmp.ne.s32.totalorder %s235, %s237
      %p244 = scmp.eq.s32.totalorder %s33, 1
      %p245 = por %p243, %p244
      %p246 = scmp.ne.s32.totalorder %s237, %s238
      %p247 = scmp.eq.s32.totalorder %s33, 0
      %p248 = por %p246, %p247
      %p249 = scmp.ne.s32.totalorder %s237, %s238
      %p250 = scmp.eq.s32.totalorder %s34, 1
      %p251 = por %p249, %p250
      %p253 = scmp.ne.s32.totalorder %s238, %s252
      %p254 = scmp.eq.s32.totalorder %s34, 0
      %p255 = por %p253, %p254
      %s257 = sadd.s32 %s256, 1
      %p260 = scmp.eq.s32.totalorder %s28, 1
      %p261 = scmp.ne.s32.totalorder %s256, %s258
      %p262 = scmp.eq.s32.totalorder %s28, 0
      %p263 = por %p261, %p262
      %p264 = scmp.ne.s32.totalorder %s256, %s258
      %p265 = scmp.eq.s32.totalorder %s33, 1
      %p266 = por %p264, %p265
      %p267 = scmp.ne.s32.totalorder %s258, %s259
      %p268 = scmp.eq.s32.totalorder %s33, 0
      %p269 = por %p267, %p268
      %p270 = scmp.ne.s32.totalorder %s258, %s259
      %p271 = scmp.eq.s32.totalorder %s34, 1
      %p272 = por %p270, %p271
      %p274 = scmp.ne.s32.totalorder %s259, %s273
      %p275 = scmp.eq.s32.totalorder %s34, 0
      %p276 = por %p274, %p275
      %s277 = ssub.s32 %s28, %s35
      %p278 = scmp.eq.s32.totalorder %s277, 0
      %s280 = sadd.s32 %s279, 1
      %s281 = scalar_select %p278, %s279, %s280
      %p284 = pneg %p278
      %p285 = scmp.eq.s32.totalorder %s28, 1
      %p286 = por %p284, %p285
      %p287 = scmp.ne.s32.totalorder %s279, %s282
      %p288 = scmp.eq.s32.totalorder %s28, 0
      %p289 = por %p287, %p288
      %p290 = scmp.ne.s32.totalorder %s279, %s282
      %p291 = scmp.eq.s32.totalorder %s33, 1
      %p292 = por %p290, %p291
      %p293 = scmp.ne.s32.totalorder %s282, %s283
      %p294 = scmp.eq.s32.totalorder %s33, 0
      %p295 = por %p293, %p294
      %p296 = scmp.ne.s32.totalorder %s282, %s283
      %p297 = scmp.eq.s32.totalorder %s34, 1
      %p298 = por %p296, %p297
      %p300 = scmp.ne.s32.totalorder %s283, %s299
      %p301 = scmp.eq.s32.totalorder %s34, 0
      %p302 = por %p300, %p301
      %p303 = scmp.le.s32.totalorder 1, %s28
      %p304 = scmp.lt.s32.totalorder %s28, 3
      %p305 = pnand %p303, %p304
      %p306 = pneg %p305
      // Predicated region
      $region9: #{tpu_custom_call.1} parent=5 // pred_check
        _
      $region10: #{tpu_custom_call.1} parent=5 // pred_check_branch
        %308 = sbr.rel (%p305) target = $region12
      $region11: #{tpu_custom_call.1} parent=5 // pred_region
        %s309 = ssub.s32 %s28, 1
        // Predicated region
        $region13: #{tpu_custom_call.1} parent=11 // pred_check
          %p310 = pneg %p101
        $region14: #{tpu_custom_call.1} parent=11 // pred_check_branch
          %312 = sbr.rel (%p310) target = $region16
        $region15: #{tpu_custom_call.1} parent=11 // pred_region
          %s314 = ssub.s32 384, 384
          %315 = vsyncadd [#allocation6], %s314
          %s316 = sshll.u32 [#allocation7], 4
          %s317 = int_to_ptr.vmem [resolvable:$true] %s316
          %322 = dma.hbm_to_vmem [thread:$0]  %s2, 384, %s317, [#allocation6], 64, 64, 4
        $region16: #{tpu_custom_call.1} parent=11 // pred_fallthru
          _
        // Predicated region
        $region17: #{tpu_custom_call.1} parent=11 // pred_check
          %p323 = pneg %p122
        $region18: #{tpu_custom_call.1} parent=11 // pred_check_branch
          %325 = sbr.rel (%p323) target = $region20
        $region19: #{tpu_custom_call.1} parent=11 // pred_region
          _
        $region20: #{tpu_custom_call.1} parent=11 // pred_fallthru
          _
        // Predicated region
        $region21: #{tpu_custom_call.1} parent=11 // pred_check
          %p326 = pneg %p143
        $region22: #{tpu_custom_call.1} parent=11 // pred_check_branch
          %328 = sbr.rel (%p326) target = $region24
        $region23: #{tpu_custom_call.1} parent=11 // pred_region
          %s330 = ssub.s32 1536, 1536
          %331 = vsyncadd [#allocation9], %s330
          %s332 = sshll.u32 [#allocation8], 4
          %s333 = int_to_ptr.vmem [resolvable:$true] %s332
          %338 = dma.hbm_to_vmem [thread:$0]  %s4, 1536, %s333, [#allocation9], 64, 64, 4
        $region24: #{tpu_custom_call.1} parent=11 // pred_fallthru
          _
        // Predicated region
        $region25: #{tpu_custom_call.1} parent=11 // pred_check
          %p339 = pneg %p164
        $region26: #{tpu_custom_call.1} parent=11 // pred_check_branch
          %341 = sbr.rel (%p339) target = $region28
        $region27: #{tpu_custom_call.1} parent=11 // pred_region
          %s343 = ssub.s32 3072, 3072
          %344 = vsyncadd [#allocation9], %s343
          %s345 = sshll.u32 [#allocation10], 4
          %s346 = int_to_ptr.vmem [resolvable:$true] %s345
          %351 = dma.hbm_to_vmem [thread:$0]  %s5, 3072, %s346, [#allocation9], 64, 64, 4
        $region28: #{tpu_custom_call.1} parent=11 // pred_fallthru
          _
        // Predicated region
        $region29: #{tpu_custom_call.1} parent=11 // pred_check
          %p352 = pneg %p185
        $region30: #{tpu_custom_call.1} parent=11 // pred_check_branch
          %354 = sbr.rel (%p352) target = $region32
        $region31: #{tpu_custom_call.1} parent=11 // pred_region
          _
        $region32: #{tpu_custom_call.1} parent=11 // pred_fallthru
          _
        // Predicated region
        $region33: #{tpu_custom_call.1} parent=11 // pred_check
          %p355 = pneg %p206
        $region34: #{tpu_custom_call.1} parent=11 // pred_check_branch
          %357 = sbr.rel (%p355) target = $region36
        $region35: #{tpu_custom_call.1} parent=11 // pred_region
          %s359 = ssub.s32 3072, 3072
          %360 = vsyncadd [#allocation12], %s359
          %s361 = sshll.u32 [#allocation11], 4
          %s362 = int_to_ptr.vmem [resolvable:$true] %s361
          %367 = dma.hbm_to_vmem [thread:$0]  %s7, 3072, %s362, [#allocation12], 64, 64, 4
        $region36: #{tpu_custom_call.1} parent=11 // pred_fallthru
          _
        // Predicated region
        $region37: #{tpu_custom_call.1} parent=11 // pred_check
          %p368 = pneg %p227
        $region38: #{tpu_custom_call.1} parent=11 // pred_check_branch
          %370 = sbr.rel (%p368) target = $region40
        $region39: #{tpu_custom_call.1} parent=11 // pred_region
          _
        $region40: #{tpu_custom_call.1} parent=11 // pred_fallthru
          _
        // Predicated region
        $region41: #{tpu_custom_call.1} parent=11 // pred_check
          %p371 = pneg %p248
        $region42: #{tpu_custom_call.1} parent=11 // pred_check_branch
          %373 = sbr.rel (%p371) target = $region44
        $region43: #{tpu_custom_call.1} parent=11 // pred_region
          _
        $region44: #{tpu_custom_call.1} parent=11 // pred_fallthru
          _
        // Predicated region
        $region45: #{tpu_custom_call.1} parent=11 // pred_check
          %p374 = pneg %p269
        $region46: #{tpu_custom_call.1} parent=11 // pred_check_branch
          %376 = sbr.rel (%p374) target = $region48
        $region47: #{tpu_custom_call.1} parent=11 // pred_region
          _
        $region48: #{tpu_custom_call.1} parent=11 // pred_fallthru
          _
      $region12: #{tpu_custom_call.1} parent=5 // pred_fallthru
        _
      %p377 = scmp.lt.s32.totalorder %s28, 2
      // Predicated region
      $region49: #{tpu_custom_call.1} parent=5 // pred_check
        %p378 = pneg %p377
      $region50: #{tpu_custom_call.1} parent=5 // pred_check_branch
        %380 = sbr.rel (%p378) target = $region52
      $region51: #{tpu_custom_call.1} parent=5 // pred_region
        // Predicated region
        $region53: #{tpu_custom_call.1} parent=51 // pred_check
          %p381 = pneg %p48
        $region54: #{tpu_custom_call.1} parent=51 // pred_check_branch
          %383 = sbr.rel (%p381) target = $region56
        $region55: #{tpu_custom_call.1} parent=51 // pred_region
          %s384 = sand.u32 %s38, 1
          %s385 = scalar_lea.sflag [#allocation3], %s384
          %s386 = sand.u32 %s38, 1
          %s387 = smul.addr %s386, 8
          %s388 = scalar_lea.vmem [#allocation2], %s387
          %s390 = ssub.s32 128, 128
          %391 = vsyncadd %s385, %s390
          %s392 = smul.addr %s28, 128
          %s393 = scalar_lea.hbm %s0, %s392
          %s395 = sshll.u32 %s388, 4
          %s396 = int_to_ptr.vmem [resolvable:$true] %s395
          %398 = dma.hbm_to_vmem [thread:$0]  %s393, 128, %s396, %s385
        $region56: #{tpu_custom_call.1} parent=51 // pred_fallthru
          _
        // Predicated region
        $region57: #{tpu_custom_call.1} parent=51 // pred_check
          %p399 = pneg %p74
        $region58: #{tpu_custom_call.1} parent=51 // pred_check_branch
          %401 = sbr.rel (%p399) target = $region60
        $region59: #{tpu_custom_call.1} parent=51 // pred_region
          %s402 = sand.u32 %s28, 1
          %s403 = scalar_lea.sflag [#allocation6], %s402
          %s404 = sand.u32 %s64, 1
          %s405 = smul.addr %s404, 16
          %s406 = scalar_lea.vmem [#allocation5], %s405
          %s408 = ssub.s32 256, 256
          %409 = vsyncadd %s403, %s408
          %s410 = smul.addr %s28, 2
          %s411 = smul.addr %s410, 128
          %s412 = scalar_lea.hbm %s1, %s411
          %s413 = sshll.u32 %s406, 4
          %s414 = int_to_ptr.vmem [resolvable:$true] %s413
          %419 = dma.hbm_to_vmem [thread:$0]  %s412, 256, %s414, %s403, 128, 128, 8
        $region60: #{tpu_custom_call.1} parent=51 // pred_fallthru
          _
      $region52: #{tpu_custom_call.1} parent=5 // pred_fallthru
        _
      %p420 = scmp.le.s32.totalorder 1, %s28
      %p421 = scmp.lt.s32.totalorder %s28, 3
      %p422 = pnand %p420, %p421
      %p423 = pneg %p422
      // Predicated region
      $region61: #{tpu_custom_call.1} parent=5 // pred_check
        _
      $region62: #{tpu_custom_call.1} parent=5 // pred_check_branch
        %425 = sbr.rel (%p422) target = $region64
      $region63: #{tpu_custom_call.1} parent=5 // pred_region
        %s426 = ssub.s32 %s28, 1
        %s427 = sand.u32 %s41, 1
        %s428 = scalar_lea.sflag [#allocation3], %s427
        %s429 = sand.u32 %s41, 1
        %s430 = smul.addr %s429, 8
        %s431 = scalar_lea.vmem [#allocation2], %s430
        // Predicated region
        $region65: #{tpu_custom_call.1} parent=63 // pred_check
          %p432 = pneg %p54
        $region66: #{tpu_custom_call.1} parent=63 // pred_check_branch
          %434 = sbr.rel (%p432) target = $region68
        $region67: #{tpu_custom_call.1} parent=63 // pred_region
          %435 = dma.done %s428, 128
        $region68: #{tpu_custom_call.1} parent=63 // pred_fallthru
          _
        %s436 = sand.u32 %s33, 1
        %s437 = scalar_lea.sflag [#allocation6], %s436
        %s438 = sand.u32 %s67, 1
        %s439 = smul.addr %s438, 16
        %s440 = scalar_lea.vmem [#allocation5], %s439
        // Predicated region
        $region69: #{tpu_custom_call.1} parent=63 // pred_check
          %p441 = pneg %p80
        $region70: #{tpu_custom_call.1} parent=63 // pred_check_branch
          %443 = sbr.rel (%p441) target = $region72
        $region71: #{tpu_custom_call.1} parent=63 // pred_region
          %444 = dma.done %s437, 256
        $region72: #{tpu_custom_call.1} parent=63 // pred_fallthru
          _
        // Predicated region
        $region73: #{tpu_custom_call.1} parent=63 // pred_check
          %p445 = pneg %p101
        $region74: #{tpu_custom_call.1} parent=63 // pred_check_branch
          %447 = sbr.rel (%p445) target = $region76
        $region75: #{tpu_custom_call.1} parent=63 // pred_region
          %448 = dma.done [#allocation6], 384
        $region76: #{tpu_custom_call.1} parent=63 // pred_fallthru
          _
        // Predicated region
        $region77: #{tpu_custom_call.1} parent=63 // pred_check
          %p449 = pneg %p143
        $region78: #{tpu_custom_call.1} parent=63 // pred_check_branch
          %451 = sbr.rel (%p449) target = $region80
        $region79: #{tpu_custom_call.1} parent=63 // pred_region
          %452 = dma.done [#allocation9], 1536
        $region80: #{tpu_custom_call.1} parent=63 // pred_fallthru
          _
        // Predicated region
        $region81: #{tpu_custom_call.1} parent=63 // pred_check
          %p453 = pneg %p164
        $region82: #{tpu_custom_call.1} parent=63 // pred_check_branch
          %455 = sbr.rel (%p453) target = $region84
        $region83: #{tpu_custom_call.1} parent=63 // pred_region
          %456 = dma.done [#allocation9], 3072
        $region84: #{tpu_custom_call.1} parent=63 // pred_fallthru
          _
        // Predicated region
        $region85: #{tpu_custom_call.1} parent=63 // pred_check
          %p457 = pneg %p206
        $region86: #{tpu_custom_call.1} parent=63 // pred_check_branch
          %459 = sbr.rel (%p457) target = $region88
        $region87: #{tpu_custom_call.1} parent=63 // pred_region
          %460 = dma.done [#allocation12], 3072
        $region88: #{tpu_custom_call.1} parent=63 // pred_fallthru
          _
        %s461 = sand.u32 %s41, 1
        %s462 = scalar_lea.sflag [#allocation3], %s461
        %s463 = sand.u32 %s41, 1
        %s464 = smul.addr %s463, 8
        %s465 = scalar_lea.vmem [#allocation2], %s464
        %p466 = pneg %p54
        %p467 = pneg %p51
        %s468 = sand.u32 %s33, 1
        %s469 = scalar_lea.sflag [#allocation6], %s468
        %s470 = sand.u32 %s67, 1
        %s471 = smul.addr %s470, 16
        %s472 = scalar_lea.vmem [#allocation5], %s471
        %p473 = pneg %p80
        %p474 = pneg %p77
        %p475 = pneg %p101
        %p476 = pneg %p98
        %p477 = pneg %p122
        %p478 = pneg %p119
        %p479 = pneg %p143
        %p480 = pneg %p140
        %p481 = pneg %p164
        %p482 = pneg %p161
        %p483 = pneg %p185
        %p484 = pneg %p182
        %p485 = pneg %p206
        %p486 = pneg %p203
        %p487 = pneg %p227
        %p488 = pneg %p224
        %p489 = pneg %p248
        %p490 = pneg %p245
        %p491 = pneg %p269
        %p492 = pneg %p266
        %p493 = pneg %p295
        %p494 = pneg %p292
        %s495 = sand.u32 %s282, 1
        %s496 = scalar_lea.sflag [#allocation4], %s495
        %s497 = sand.u32 %s282, 1
        %s498 = smul.addr %s497, 16
        %s499 = scalar_lea.vmem [#allocation13], %s498
        %v501 = vld [vmem:[%s431] sm:$0xff]
        %v502 = vpack.c.bf16 %v501, %v501
        %v503 = vld [vmem:[%s440] sm:$0xff]
        %v504 = vld [vmem:[%s440 + $0x8] sm:$0xff]
        %v505 = vpack.c.bf16 %v504, %v503
        %s506 = scalar_lea.vmem [#allocation10], 64
        %v507 = vld [vmem:[%s506] sm:$0xf]
        %v508 = vld [vmem:[%s506 + $0x4] sm:$0xf]
        %v509 = vld [vmem:[%s506 + $0x8] sm:$0xf]
        %v510 = vld [vmem:[%s506 + $0xc] sm:$0xf]
        %v511 = vld [vmem:[%s506 + $0x10] sm:$0xf]
        %v512 = vld [vmem:[%s506 + $0x14] sm:$0xf]
        %v513 = vld [vmem:[%s506 + $0x18] sm:$0xf]
        %v514 = vld [vmem:[%s506 + $0x1c] sm:$0xf]
        %v515 = vld [vmem:[%s506 + $0x20] sm:$0xf]
        %v516 = vld [vmem:[%s506 + $0x24] sm:$0xf]
        %v517 = vld [vmem:[%s506 + $0x28] sm:$0xf]
        %v518 = vld [vmem:[%s506 + $0x2c] sm:$0xf]
        %v519 = vld [vmem:[%s506 + $0x30] sm:$0xf]
        %v520 = vld [vmem:[%s506 + $0x34] sm:$0xf]
        %v521 = vld [vmem:[%s506 + $0x38] sm:$0xf]
        %v522 = vld [vmem:[%s506 + $0x3c] sm:$0xf]
        %v523 = vld [vmem:[#allocation7] sm:$0xf]
        %v524 = vld [vmem:[#allocation7 + $0x4] sm:$0xf]
        %v527 = vunpack.c.l.b16 %v523
        %v528 = vunpack.c.l.b16 %v524
        %v529 = vpack.c.b16 %v528, %v527
        %vm530 = vcmask 130048
        %v532 = vsel %vm530, %v529, 0
        %534 = vmatprep.subr.bf16.mxu0 0
        %535 = vmatpush1.bf16.msra.mxu0 %v505
        %536 = vmatprep.subr.bf16.mxu0 0
        %537 = vmatpush1.bf16.msra.mxu0 0
        %538 = vmatprep.subr.bf16.mxu0 0
        %539 = vmatpush1.bf16.msra.mxu0 0
        %540 = vmatprep.subr.bf16.mxu0 0
        %541 = vmatpush1.bf16.msra.mxu0 0
        %542 = vmatprep.subr.bf16.mxu0 0
        %543 = vmatpush1.bf16.msra.mxu0 0
        %544 = vmatprep.subr.bf16.mxu0 0
        %545 = vmatpush1.bf16.msra.mxu0 0
        %546 = vmatprep.subr.bf16.mxu0 0
        %547 = vmatpush1.bf16.msra.mxu0 0
        %548 = vmatprep.subr.bf16.mxu0 0
        %549 = vmatpush1.bf16.msra.mxu0 0
        %550 = vmatprep.subr.bf16.mxu0 0
        %551 = vmatpush1.bf16.msra.mxu0 0
        %552 = vmatprep.subr.bf16.mxu0 0
        %553 = vmatpush1.bf16.msra.mxu0 0
        %554 = vmatprep.subr.bf16.mxu0 0
        %555 = vmatpush1.bf16.msra.mxu0 0
        %556 = vmatprep.subr.bf16.mxu0 0
        %557 = vmatpush1.bf16.msra.mxu0 0
        %558 = vmatprep.subr.bf16.mxu0 0
        %559 = vmatpush1.bf16.msra.mxu0 0
        %560 = vmatprep.subr.bf16.mxu0 0
        %561 = vmatpush1.bf16.msra.mxu0 0
        %562 = vmatprep.subr.bf16.mxu0 0
        %563 = vmatpush1.bf16.msra.mxu0 0
        %564 = vmatprep.subr.bf16.mxu0 0
        %565 = vmatpush1.bf16.msra.mxu0 0
        %566 = vmatprep.mubr.bf16.mxu0 0
        %567 = vmatmul.mubr.bf16.gmra.mrb[0].mxu0 %v532
        %v568 = vpop.f32.mrb[0].mxu0
        %v569 = vadd.f32 0.0, %v568
        %v570 = vpop.f32.mrb[0].mxu0
        %v571 = vpop.f32.mrb[0].mxu0
        %v572 = vadd.f32 0.0, %v571
        %v573 = vpop.f32.mrb[0].mxu0
        %574 = vdwg.mxu0
        %v575 = vpack.c.bf16 %v572, %v569
        %v576 = vld [vmem:[#allocation10] sm:$0xf]
        %v577 = vld [vmem:[#allocation10 + $0x4] sm:$0xf]
        %v578 = vld [vmem:[#allocation10 + $0x8] sm:$0xf]
        %v579 = vld [vmem:[#allocation10 + $0xc] sm:$0xf]
        %v580 = vld [vmem:[#allocation10 + $0x10] sm:$0xf]
        %v581 = vld [vmem:[#allocation10 + $0x14] sm:$0xf]
        %v582 = vld [vmem:[#allocation10 + $0x18] sm:$0xf]
        %v583 = vld [vmem:[#allocation10 + $0x1c] sm:$0xf]
        %v584 = vld [vmem:[#allocation10 + $0x20] sm:$0xf]
        %v585 = vld [vmem:[#allocation10 + $0x24] sm:$0xf]
        %v586 = vld [vmem:[#allocation10 + $0x28] sm:$0xf]
        %v587 = vld [vmem:[#allocation10 + $0x2c] sm:$0xf]
        %v588 = vld [vmem:[#allocation10 + $0x30] sm:$0xf]
        %v589 = vld [vmem:[#allocation10 + $0x34] sm:$0xf]
        %v590 = vld [vmem:[#allocation10 + $0x38] sm:$0xf]
        %v591 = vld [vmem:[#allocation10 + $0x3c] sm:$0xf]
        %v608 = vunpack.c.l.b16 %v576
        %v609 = vunpack.c.l.b16 %v577
        %v610 = vunpack.c.l.b16 %v578
        %v611 = vunpack.c.l.b16 %v579
        %v612 = vunpack.c.l.b16 %v580
        %v613 = vunpack.c.l.b16 %v581
        %v614 = vunpack.c.l.b16 %v582
        %v615 = vunpack.c.l.b16 %v583
        %v616 = vunpack.c.l.b16 %v584
        %v617 = vunpack.c.l.b16 %v585
        %v618 = vunpack.c.l.b16 %v586
        %v619 = vunpack.c.l.b16 %v587
        %v620 = vunpack.c.l.b16 %v588
        %v621 = vunpack.c.l.b16 %v589
        %v622 = vunpack.c.l.b16 %v590
        %v623 = vunpack.c.l.b16 %v591
        %v624 = vpack.c.b16 %v609, %v608
        %v625 = vpack.c.b16 %v611, %v610
        %v626 = vpack.c.b16 %v613, %v612
        %v627 = vpack.c.b16 %v615, %v614
        %v628 = vpack.c.b16 %v617, %v616
        %v629 = vpack.c.b16 %v619, %v618
        %v630 = vpack.c.b16 %v621, %v620
        %v631 = vpack.c.b16 %v623, %v622
        %640 = vmatprep.subr.bf16.mxu0 0
        %641 = vmatpush1.bf16.msra.mxu0 %v624
        %642 = vmatprep.subr.bf16.mxu0 0
        %643 = vmatpush1.bf16.msra.mxu0 %v625
        %644 = vmatprep.subr.bf16.mxu0 0
        %645 = vmatpush1.bf16.msra.mxu0 %v626
        %646 = vmatprep.subr.bf16.mxu0 0
        %647 = vmatpush1.bf16.msra.mxu0 %v627
        %648 = vmatprep.subr.bf16.mxu0 0
        %649 = vmatpush1.bf16.msra.mxu0 %v628
        %650 = vmatprep.subr.bf16.mxu0 0
        %651 = vmatpush1.bf16.msra.mxu0 %v629
        %652 = vmatprep.subr.bf16.mxu0 0
        %653 = vmatpush1.bf16.msra.mxu0 %v630
        %654 = vmatprep.subr.bf16.mxu0 0
        %655 = vmatpush1.bf16.msra.mxu0 %v631
        %656 = vmatprep.subr.bf16.mxu0 0
        %657 = vmatpush1.bf16.msra.mxu0 0
        %658 = vmatprep.subr.bf16.mxu0 0
        %659 = vmatpush1.bf16.msra.mxu0 0
        %660 = vmatprep.subr.bf16.mxu0 0
        %661 = vmatpush1.bf16.msra.mxu0 0
        %662 = vmatprep.subr.bf16.mxu0 0
        %663 = vmatpush1.bf16.msra.mxu0 0
        %664 = vmatprep.subr.bf16.mxu0 0
        %665 = vmatpush1.bf16.msra.mxu0 0
        %666 = vmatprep.subr.bf16.mxu0 0
        %667 = vmatpush1.bf16.msra.mxu0 0
        %668 = vmatprep.subr.bf16.mxu0 0
        %669 = vmatpush1.bf16.msra.mxu0 0
        %670 = vmatprep.subr.bf16.mxu0 0
        %671 = vmatpush1.bf16.msra.mxu0 0
        %672 = vmatprep.mubr.bf16.mxu0 0
        %673 = vmatmul.mubr.bf16.gmra.mrb[0].mxu0 %v575
        %v674 = vpop.f32.mrb[0].mxu0
        %v675 = vadd.f32 0.0, %v674
        %v676 = vpop.f32.mrb[0].mxu0
        %v677 = vpop.f32.mrb[0].mxu0
        %v678 = vadd.f32 0.0, %v677
        %v679 = vpop.f32.mrb[0].mxu0
        %680 = vdwg.mxu0
        %v697 = vunpack.c.l.b16 %v507
        %v698 = vunpack.c.l.b16 %v508
        %v699 = vunpack.c.l.b16 %v509
        %v700 = vunpack.c.l.b16 %v510
        %v701 = vunpack.c.l.b16 %v511
        %v702 = vunpack.c.l.b16 %v512
        %v703 = vunpack.c.l.b16 %v513
        %v704 = vunpack.c.l.b16 %v514
        %v705 = vunpack.c.l.b16 %v515
        %v706 = vunpack.c.l.b16 %v516
        %v707 = vunpack.c.l.b16 %v517
        %v708 = vunpack.c.l.b16 %v518
        %v709 = vunpack.c.l.b16 %v519
        %v710 = vunpack.c.l.b16 %v520
        %v711 = vunpack.c.l.b16 %v521
        %v712 = vunpack.c.l.b16 %v522
        %v713 = vpack.c.b16 %v698, %v697
        %v714 = vpack.c.b16 %v700, %v699
        %v715 = vpack.c.b16 %v702, %v701
        %v716 = vpack.c.b16 %v704, %v703
        %v717 = vpack.c.b16 %v706, %v705
        %v718 = vpack.c.b16 %v708, %v707
        %v719 = vpack.c.b16 %v710, %v709
        %v720 = vpack.c.b16 %v712, %v711
        %729 = vmatprep.subr.bf16.mxu0 0
        %730 = vmatpush1.bf16.msra.mxu0 %v713
        %731 = vmatprep.subr.bf16.mxu0 0
        %732 = vmatpush1.bf16.msra.mxu0 %v714
        %733 = vmatprep.subr.bf16.mxu0 0
        %734 = vmatpush1.bf16.msra.mxu0 %v715
        %735 = vmatprep.subr.bf16.mxu0 0
        %736 = vmatpush1.bf16.msra.mxu0 %v716
        %737 = vmatprep.subr.bf16.mxu0 0
        %738 = vmatpush1.bf16.msra.mxu0 %v717
        %739 = vmatprep.subr.bf16.mxu0 0
        %740 = vmatpush1.bf16.msra.mxu0 %v718
        %741 = vmatprep.subr.bf16.mxu0 0
        %742 = vmatpush1.bf16.msra.mxu0 %v719
        %743 = vmatprep.subr.bf16.mxu0 0
        %744 = vmatpush1.bf16.msra.mxu0 %v720
        %745 = vmatprep.subr.bf16.mxu0 0
        %746 = vmatpush1.bf16.msra.mxu0 0
        %747 = vmatprep.subr.bf16.mxu0 0
        %748 = vmatpush1.bf16.msra.mxu0 0
        %749 = vmatprep.subr.bf16.mxu0 0
        %750 = vmatpush1.bf16.msra.mxu0 0
        %751 = vmatprep.subr.bf16.mxu0 0
        %752 = vmatpush1.bf16.msra.mxu0 0
        %753 = vmatprep.subr.bf16.mxu0 0
        %754 = vmatpush1.bf16.msra.mxu0 0
        %755 = vmatprep.subr.bf16.mxu0 0
        %756 = vmatpush1.bf16.msra.mxu0 0
        %757 = vmatprep.subr.bf16.mxu0 0
        %758 = vmatpush1.bf16.msra.mxu0 0
        %759 = vmatprep.subr.bf16.mxu0 0
        %760 = vmatpush1.bf16.msra.mxu0 0
        %761 = vmatprep.mubr.bf16.mxu0 0
        %762 = vmatmul.mubr.bf16.gmra.mrb[0].mxu0 %v505
        %v763 = vpop.f32.mrb[0].mxu0
        %v764 = vadd.f32 %v675, %v763
        %v765 = vpop.f32.mrb[0].mxu0
        %v766 = vpop.f32.mrb[0].mxu0
        %v767 = vadd.f32 %v678, %v766
        %v768 = vpop.f32.mrb[0].mxu0
        %769 = vdwg.mxu0
        %s770 = scalar_lea.vmem [#allocation7], 16
        %v771 = vld [vmem:[%s770] sm:$0xf]
        %v772 = vld [vmem:[%s770 + $0x4] sm:$0xf]
        %v775 = vunpack.c.l.b16 %v771
        %v776 = vunpack.c.l.b16 %v772
        %v777 = vpack.c.b16 %v776, %v775
        %v779 = vsel %vm530, %v777, 0
        %781 = vmatprep.subr.bf16.mxu0 0
        %782 = vmatpush1.bf16.msra.mxu0 %v505
        %783 = vmatprep.subr.bf16.mxu0 0
        %784 = vmatpush1.bf16.msra.mxu0 0
        %785 = vmatprep.subr.bf16.mxu0 0
        %786 = vmatpush1.bf16.msra.mxu0 0
        %787 = vmatprep.subr.bf16.mxu0 0
        %788 = vmatpush1.bf16.msra.mxu0 0
        %789 = vmatprep.subr.bf16.mxu0 0
        %790 = vmatpush1.bf16.msra.mxu0 0
        %791 = vmatprep.subr.bf16.mxu0 0
        %792 = vmatpush1.bf16.msra.mxu0 0
        %793 = vmatprep.subr.bf16.mxu0 0
        %794 = vmatpush1.bf16.msra.mxu0 0
        %795 = vmatprep.subr.bf16.mxu0 0
        %796 = vmatpush1.bf16.msra.mxu0 0
        %797 = vmatprep.subr.bf16.mxu0 0
        %798 = vmatpush1.bf16.msra.mxu0 0
        %799 = vmatprep.subr.bf16.mxu0 0
        %800 = vmatpush1.bf16.msra.mxu0 0
        %801 = vmatprep.subr.bf16.mxu0 0
        %802 = vmatpush1.bf16.msra.mxu0 0
        %803 = vmatprep.subr.bf16.mxu0 0
        %804 = vmatpush1.bf16.msra.mxu0 0
        %805 = vmatprep.subr.bf16.mxu0 0
        %806 = vmatpush1.bf16.msra.mxu0 0
        %807 = vmatprep.subr.bf16.mxu0 0
        %808 = vmatpush1.bf16.msra.mxu0 0
        %809 = vmatprep.subr.bf16.mxu0 0
        %810 = vmatpush1.bf16.msra.mxu0 0
        %811 = vmatprep.subr.bf16.mxu0 0
        %812 = vmatpush1.bf16.msra.mxu0 0
        %813 = vmatprep.mubr.bf16.mxu0 0
        %814 = vmatmul.mubr.bf16.gmra.mrb[0].mxu0 %v779
        %v815 = vpop.f32.mrb[0].mxu0
        %v816 = vadd.f32 0.0, %v815
        %v817 = vpop.f32.mrb[0].mxu0
        %v818 = vpop.f32.mrb[0].mxu0
        %v819 = vadd.f32 0.0, %v818
        %v820 = vpop.f32.mrb[0].mxu0
        %821 = vdwg.mxu0
        %v822 = vpack.c.bf16 %v819, %v816
        %s823 = scalar_lea.vmem [#allocation10], 128
        %v824 = vld [vmem:[%s823] sm:$0xf]
        %v825 = vld [vmem:[%s823 + $0x4] sm:$0xf]
        %v826 = vld [vmem:[%s823 + $0x8] sm:$0xf]
        %v827 = vld [vmem:[%s823 + $0xc] sm:$0xf]
        %v828 = vld [vmem:[%s823 + $0x10] sm:$0xf]
        %v829 = vld [vmem:[%s823 + $0x14] sm:$0xf]
        %v830 = vld [vmem:[%s823 + $0x18] sm:$0xf]
        %v831 = vld [vmem:[%s823 + $0x1c] sm:$0xf]
        %v832 = vld [vmem:[%s823 + $0x20] sm:$0xf]
        %v833 = vld [vmem:[%s823 + $0x24] sm:$0xf]
        %v834 = vld [vmem:[%s823 + $0x28] sm:$0xf]
        %v835 = vld [vmem:[%s823 + $0x2c] sm:$0xf]
        %v836 = vld [vmem:[%s823 + $0x30] sm:$0xf]
        %v837 = vld [vmem:[%s823 + $0x34] sm:$0xf]
        %v838 = vld [vmem:[%s823 + $0x38] sm:$0xf]
        %v839 = vld [vmem:[%s823 + $0x3c] sm:$0xf]
        %v856 = vunpack.c.l.b16 %v824
        %v857 = vunpack.c.l.b16 %v825
        %v858 = vunpack.c.l.b16 %v826
        %v859 = vunpack.c.l.b16 %v827
        %v860 = vunpack.c.l.b16 %v828
        %v861 = vunpack.c.l.b16 %v829
        %v862 = vunpack.c.l.b16 %v830
        %v863 = vunpack.c.l.b16 %v831
        %v864 = vunpack.c.l.b16 %v832
        %v865 = vunpack.c.l.b16 %v833
        %v866 = vunpack.c.l.b16 %v834
        %v867 = vunpack.c.l.b16 %v835
        %v868 = vunpack.c.l.b16 %v836
        %v869 = vunpack.c.l.b16 %v837
        %v870 = vunpack.c.l.b16 %v838
        %v871 = vunpack.c.l.b16 %v839
        %v872 = vpack.c.b16 %v857, %v856
        %v873 = vpack.c.b16 %v859, %v858
        %v874 = vpack.c.b16 %v861, %v860
        %v875 = vpack.c.b16 %v863, %v862
        %v876 = vpack.c.b16 %v865, %v864
        %v877 = vpack.c.b16 %v867, %v866
        %v878 = vpack.c.b16 %v869, %v868
        %v879 = vpack.c.b16 %v871, %v870
        %888 = vmatprep.subr.bf16.mxu0 0
        %889 = vmatpush1.bf16.msra.mxu0 %v872
        %890 = vmatprep.subr.bf16.mxu0 0
        %891 = vmatpush1.bf16.msra.mxu0 %v873
        %892 = vmatprep.subr.bf16.mxu0 0
        %893 = vmatpush1.bf16.msra.mxu0 %v874
        %894 = vmatprep.subr.bf16.mxu0 0
        %895 = vmatpush1.bf16.msra.mxu0 %v875
        %896 = vmatprep.subr.bf16.mxu0 0
        %897 = vmatpush1.bf16.msra.mxu0 %v876
        %898 = vmatprep.subr.bf16.mxu0 0
        %899 = vmatpush1.bf16.msra.mxu0 %v877
        %900 = vmatprep.subr.bf16.mxu0 0
        %901 = vmatpush1.bf16.msra.mxu0 %v878
        %902 = vmatprep.subr.bf16.mxu0 0
        %903 = vmatpush1.bf16.msra.mxu0 %v879
        %904 = vmatprep.subr.bf16.mxu0 0
        %905 = vmatpush1.bf16.msra.mxu0 0
        %906 = vmatprep.subr.bf16.mxu0 0
        %907 = vmatpush1.bf16.msra.mxu0 0
        %908 = vmatprep.subr.bf16.mxu0 0
        %909 = vmatpush1.bf16.msra.mxu0 0
        %910 = vmatprep.subr.bf16.mxu0 0
        %911 = vmatpush1.bf16.msra.mxu0 0
        %912 = vmatprep.subr.bf16.mxu0 0
        %913 = vmatpush1.bf16.msra.mxu0 0
        %914 = vmatprep.subr.bf16.mxu0 0
        %915 = vmatpush1.bf16.msra.mxu0 0
        %916 = vmatprep.subr.bf16.mxu0 0
        %917 = vmatpush1.bf16.msra.mxu0 0
        %918 = vmatprep.subr.bf16.mxu0 0
        %919 = vmatpush1.bf16.msra.mxu0 0
        %920 = vmatprep.mubr.bf16.mxu0 0
        %921 = vmatmul.mubr.bf16.gmra.mrb[0].mxu0 %v822
        %v922 = vpop.f32.mrb[0].mxu0
        %v923 = vadd.f32 0.0, %v922
        %v924 = vpop.f32.mrb[0].mxu0
        %v925 = vpop.f32.mrb[0].mxu0
        %v926 = vadd.f32 0.0, %v925
        %v927 = vpop.f32.mrb[0].mxu0
        %928 = vdwg.mxu0
        %v929 = vadd.f32 %v764, %v923
        %v930 = vadd.f32 %v767, %v926
        %v931 = vld [vmem:[%s3] sm:$0xf]
        %v932 = vld [vmem:[%s3 + $0x4] sm:$0xf]
        %v935 = vunpack.c.l.b16 %v931
        %v936 = vunpack.c.l.b16 %v932
        %v937 = vpack.c.b16 %v936, %v935
        %vm938 = vcmask 64512
        %v940 = vsel %vm938, %v937, 0
        %vm942 = vcmask 1043456
        %v944 = vsel %vm942, %v502, 0
        %946 = vmatprep.subr.bf16.mxu0 0
        %947 = vmatpush1.bf16.msra.mxu0 %v944
        %948 = vmatprep.subr.bf16.mxu0 0
        %949 = vmatpush1.bf16.msra.mxu0 0
        %950 = vmatprep.subr.bf16.mxu0 0
        %951 = vmatpush1.bf16.msra.mxu0 0
        %952 = vmatprep.subr.bf16.mxu0 0
        %953 = vmatpush1.bf16.msra.mxu0 0
        %954 = vmatprep.subr.bf16.mxu0 0
        %955 = vmatpush1.bf16.msra.mxu0 0
        %956 = vmatprep.subr.bf16.mxu0 0
        %957 = vmatpush1.bf16.msra.mxu0 0
        %958 = vmatprep.subr.bf16.mxu0 0
        %959 = vmatpush1.bf16.msra.mxu0 0
        %960 = vmatprep.subr.bf16.mxu0 0
        %961 = vmatpush1.bf16.msra.mxu0 0
        %962 = vmatprep.subr.bf16.mxu0 0
        %963 = vmatpush1.bf16.msra.mxu0 0
        %964 = vmatprep.subr.bf16.mxu0 0
        %965 = vmatpush1.bf16.msra.mxu0 0
        %966 = vmatprep.subr.bf16.mxu0 0
        %967 = vmatpush1.bf16.msra.mxu0 0
        %968 = vmatprep.subr.bf16.mxu0 0
        %969 = vmatpush1.bf16.msra.mxu0 0
        %970 = vmatprep.subr.bf16.mxu0 0
        %971 = vmatpush1.bf16.msra.mxu0 0
        %972 = vmatprep.subr.bf16.mxu0 0
        %973 = vmatpush1.bf16.msra.mxu0 0
        %974 = vmatprep.subr.bf16.mxu0 0
        %975 = vmatpush1.bf16.msra.mxu0 0
        %976 = vmatprep.subr.bf16.mxu0 0
        %977 = vmatpush1.bf16.msra.mxu0 0
        %978 = vmatprep.mubr.bf16.mxu0 0
        %979 = vmatmul.mubr.bf16.gmra.mrb[0].mxu0 %v940
        %v980 = vpop.f32.mrb[0].mxu0
        %v981 = vadd.f32 0.0, %v980
        %v982 = vpop.f32.mrb[0].mxu0
        %v983 = vpop.f32.mrb[0].mxu0
        %v984 = vadd.f32 0.0, %v983
        %v985 = vpop.f32.mrb[0].mxu0
        %986 = vdwg.mxu0
        %v987 = vpack.c.bf16 %v984, %v981
        %v988 = vld [vmem:[#allocation8] sm:$0xf]
        %v989 = vld [vmem:[#allocation8 + $0x4] sm:$0xf]
        %v990 = vld [vmem:[#allocation8 + $0x8] sm:$0xf]
        %v991 = vld [vmem:[#allocation8 + $0xc] sm:$0xf]
        %v992 = vld [vmem:[#allocation8 + $0x10] sm:$0xf]
        %v993 = vld [vmem:[#allocation8 + $0x14] sm:$0xf]
        %v994 = vld [vmem:[#allocation8 + $0x18] sm:$0xf]
        %v995 = vld [vmem:[#allocation8 + $0x1c] sm:$0xf]
        %v1004 = vunpack.c.l.b16 %v988
        %v1005 = vunpack.c.l.b16 %v989
        %v1006 = vunpack.c.l.b16 %v990
        %v1007 = vunpack.c.l.b16 %v991
        %v1008 = vunpack.c.l.b16 %v992
        %v1009 = vunpack.c.l.b16 %v993
        %v1010 = vunpack.c.l.b16 %v994
        %v1011 = vunpack.c.l.b16 %v995
        %v1012 = vpack.c.b16 %v1005, %v1004
        %v1013 = vpack.c.b16 %v1007, %v1006
        %v1014 = vpack.c.b16 %v1009, %v1008
        %v1015 = vpack.c.b16 %v1011, %v1010
        %vm1020 = vcmask 523264
        %v1022 = vsel %vm1020, %v987, 0
        %1024 = vmatprep.subr.bf16.mxu0 0
        %1025 = vmatpush1.bf16.msra.mxu0 %v1012
        %1026 = vmatprep.subr.bf16.mxu0 0
        %1027 = vmatpush1.bf16.msra.mxu0 %v1013
        %1028 = vmatprep.subr.bf16.mxu0 0
        %1029 = vmatpush1.bf16.msra.mxu0 %v1014
        %1030 = vmatprep.subr.bf16.mxu0 0
        %1031 = vmatpush1.bf16.msra.mxu0 %v1015
        %1032 = vmatprep.subr.bf16.mxu0 0
        %1033 = vmatpush1.bf16.msra.mxu0 0
        %1034 = vmatprep.subr.bf16.mxu0 0
        %1035 = vmatpush1.bf16.msra.mxu0 0
        %1036 = vmatprep.subr.bf16.mxu0 0
        %1037 = vmatpush1.bf16.msra.mxu0 0
        %1038 = vmatprep.subr.bf16.mxu0 0
        %1039 = vmatpush1.bf16.msra.mxu0 0
        %1040 = vmatprep.subr.bf16.mxu0 0
        %1041 = vmatpush1.bf16.msra.mxu0 0
        %1042 = vmatprep.subr.bf16.mxu0 0
        %1043 = vmatpush1.bf16.msra.mxu0 0
        %1044 = vmatprep.subr.bf16.mxu0 0
        %1045 = vmatpush1.bf16.msra.mxu0 0
        %1046 = vmatprep.subr.bf16.mxu0 0
        %1047 = vmatpush1.bf16.msra.mxu0 0
        %1048 = vmatprep.subr.bf16.mxu0 0
        %1049 = vmatpush1.bf16.msra.mxu0 0
        %1050 = vmatprep.subr.bf16.mxu0 0
        %1051 = vmatpush1.bf16.msra.mxu0 0
        %1052 = vmatprep.subr.bf16.mxu0 0
        %1053 = vmatpush1.bf16.msra.mxu0 0
        %1054 = vmatprep.subr.bf16.mxu0 0
        %1055 = vmatpush1.bf16.msra.mxu0 0
        %1056 = vmatprep.mubr.bf16.mxu0 0
        %1057 = vmatmul.mubr.bf16.gmra.mrb[0].mxu0 %v1022
        %v1058 = vpop.f32.mrb[0].mxu0
        %v1059 = vadd.f32 0.0, %v1058
        %v1060 = vpop.f32.mrb[0].mxu0
        %v1061 = vpop.f32.mrb[0].mxu0
        %v1062 = vadd.f32 0.0, %v1061
        %v1063 = vpop.f32.mrb[0].mxu0
        %1064 = vdwg.mxu0
        %v1065 = vadd.f32 %v929, %v1059
        %v1066 = vadd.f32 %v930, %v1062
        %s1067 = scalar_lea.vmem %s3, 8
        %v1068 = vld [vmem:[%s1067] sm:$0xf]
        %v1069 = vld [vmem:[%s1067 + $0x4] sm:$0xf]
        %v1072 = vunpack.c.l.b16 %v1068
        %v1073 = vunpack.c.l.b16 %v1069
        %v1074 = vpack.c.b16 %v1073, %v1072
        %v1076 = vsel %vm938, %v1074, 0
        %1078 = vmatprep.subr.bf16.mxu0 0
        %1079 = vmatpush1.bf16.msra.mxu0 %v944
        %1080 = vmatprep.subr.bf16.mxu0 0
        %1081 = vmatpush1.bf16.msra.mxu0 0
        %1082 = vmatprep.subr.bf16.mxu0 0
        %1083 = vmatpush1.bf16.msra.mxu0 0
        %1084 = vmatprep.subr.bf16.mxu0 0
        %1085 = vmatpush1.bf16.msra.mxu0 0
        %1086 = vmatprep.subr.bf16.mxu0 0
        %1087 = vmatpush1.bf16.msra.mxu0 0
        %1088 = vmatprep.subr.bf16.mxu0 0
        %1089 = vmatpush1.bf16.msra.mxu0 0
        %1090 = vmatprep.subr.bf16.mxu0 0
        %1091 = vmatpush1.bf16.msra.mxu0 0
        %1092 = vmatprep.subr.bf16.mxu0 0
        %1093 = vmatpush1.bf16.msra.mxu0 0
        %1094 = vmatprep.subr.bf16.mxu0 0
        %1095 = vmatpush1.bf16.msra.mxu0 0
        %1096 = vmatprep.subr.bf16.mxu0 0
        %1097 = vmatpush1.bf16.msra.mxu0 0
        %1098 = vmatprep.subr.bf16.mxu0 0
        %1099 = vmatpush1.bf16.msra.mxu0 0
        %1100 = vmatprep.subr.bf16.mxu0 0
        %1101 = vmatpush1.bf16.msra.mxu0 0
        %1102 = vmatprep.subr.bf16.mxu0 0
        %1103 = vmatpush1.bf16.msra.mxu0 0
        %1104 = vmatprep.subr.bf16.mxu0 0
        %1105 = vmatpush1.bf16.msra.mxu0 0
        %1106 = vmatprep.subr.bf16.mxu0 0
        %1107 = vmatpush1.bf16.msra.mxu0 0
        %1108 = vmatprep.subr.bf16.mxu0 0
        %1109 = vmatpush1.bf16.msra.mxu0 0
        %1110 = vmatprep.mubr.bf16.mxu0 0
        %1111 = vmatmul.mubr.bf16.gmra.mrb[0].mxu0 %v1076
        %v1112 = vpop.f32.mrb[0].mxu0
        %v1113 = vadd.f32 0.0, %v1112
        %v1114 = vpop.f32.mrb[0].mxu0
        %v1115 = vpop.f32.mrb[0].mxu0
        %v1116 = vadd.f32 0.0, %v1115
        %v1117 = vpop.f32.mrb[0].mxu0
        %1118 = vdwg.mxu0
        %v1119 = vpack.c.bf16 %v1116, %v1113
        %s1120 = scalar_lea.vmem [#allocation8], 32
        %v1121 = vld [vmem:[%s1120] sm:$0xf]
        %v1122 = vld [vmem:[%s1120 + $0x4] sm:$0xf]
        %v1123 = vld [vmem:[%s1120 + $0x8] sm:$0xf]
        %v1124 = vld [vmem:[%s1120 + $0xc] sm:$0xf]
        %v1125 = vld [vmem:[%s1120 + $0x10] sm:$0xf]
        %v1126 = vld [vmem:[%s1120 + $0x14] sm:$0xf]
        %v1127 = vld [vmem:[%s1120 + $0x18] sm:$0xf]
        %v1128 = vld [vmem:[%s1120 + $0x1c] sm:$0xf]
        %v1137 = vunpack.c.l.b16 %v1121
        %v1138 = vunpack.c.l.b16 %v1122
        %v1139 = vunpack.c.l.b16 %v1123
        %v1140 = vunpack.c.l.b16 %v1124
        %v1141 = vunpack.c.l.b16 %v1125
        %v1142 = vunpack.c.l.b16 %v1126
        %v1143 = vunpack.c.l.b16 %v1127
        %v1144 = vunpack.c.l.b16 %v1128
        %v1145 = vpack.c.b16 %v1138, %v1137
        %v1146 = vpack.c.b16 %v1140, %v1139
        %v1147 = vpack.c.b16 %v1142, %v1141
        %v1148 = vpack.c.b16 %v1144, %v1143
        %v1154 = vsel %vm1020, %v1119, 0
        %1156 = vmatprep.subr.bf16.mxu0 0
        %1157 = vmatpush1.bf16.msra.mxu0 %v1145
        %1158 = vmatprep.subr.bf16.mxu0 0
        %1159 = vmatpush1.bf16.msra.mxu0 %v1146
        %1160 = vmatprep.subr.bf16.mxu0 0
        %1161 = vmatpush1.bf16.msra.mxu0 %v1147
        %1162 = vmatprep.subr.bf16.mxu0 0
        %1163 = vmatpush1.bf16.msra.mxu0 %v1148
        %1164 = vmatprep.subr.bf16.mxu0 0
        %1165 = vmatpush1.bf16.msra.mxu0 0
        %1166 = vmatprep.subr.bf16.mxu0 0
        %1167 = vmatpush1.bf16.msra.mxu0 0
        %1168 = vmatprep.subr.bf16.mxu0 0
        %1169 = vmatpush1.bf16.msra.mxu0 0
        %1170 = vmatprep.subr.bf16.mxu0 0
        %1171 = vmatpush1.bf16.msra.mxu0 0
        %1172 = vmatprep.subr.bf16.mxu0 0
        %1173 = vmatpush1.bf16.msra.mxu0 0
        %1174 = vmatprep.subr.bf16.mxu0 0
        %1175 = vmatpush1.bf16.msra.mxu0 0
        %1176 = vmatprep.subr.bf16.mxu0 0
        %1177 = vmatpush1.bf16.msra.mxu0 0
        %1178 = vmatprep.subr.bf16.mxu0 0
        %1179 = vmatpush1.bf16.msra.mxu0 0
        %1180 = vmatprep.subr.bf16.mxu0 0
        %1181 = vmatpush1.bf16.msra.mxu0 0
        %1182 = vmatprep.subr.bf16.mxu0 0
        %1183 = vmatpush1.bf16.msra.mxu0 0
        %1184 = vmatprep.subr.bf16.mxu0 0
        %1185 = vmatpush1.bf16.msra.mxu0 0
        %1186 = vmatprep.subr.bf16.mxu0 0
        %1187 = vmatpush1.bf16.msra.mxu0 0
        %1188 = vmatprep.mubr.bf16.mxu0 0
        %1189 = vmatmul.mubr.bf16.gmra.mrb[0].mxu0 %v1154
        %v1190 = vpop.f32.mrb[0].mxu0
        %v1191 = vadd.f32 0.0, %v1190
        %v1192 = vpop.f32.mrb[0].mxu0
        %v1193 = vpop.f32.mrb[0].mxu0
        %v1194 = vadd.f32 0.0, %v1193
        %v1195 = vpop.f32.mrb[0].mxu0
        %1196 = vdwg.mxu0
        %v1197 = vadd.f32 %v1065, %v1191
        %v1198 = vadd.f32 %v1066, %v1194
        %s1199 = scalar_lea.vmem %s3, 16
        %v1200 = vld [vmem:[%s1199] sm:$0xf]
        %v1201 = vld [vmem:[%s1199 + $0x4] sm:$0xf]
        %v1204 = vunpack.c.l.b16 %v1200
        %v1205 = vunpack.c.l.b16 %v1201
        %v1206 = vpack.c.b16 %v1205, %v1204
        %v1208 = vsel %vm938, %v1206, 0
        %1210 = vmatprep.subr.bf16.mxu0 0
        %1211 = vmatpush1.bf16.msra.mxu0 %v944
        %1212 = vmatprep.subr.bf16.mxu0 0
        %1213 = vmatpush1.bf16.msra.mxu0 0
        %1214 = vmatprep.subr.bf16.mxu0 0
        %1215 = vmatpush1.bf16.msra.mxu0 0
        %1216 = vmatprep.subr.bf16.mxu0 0
        %1217 = vmatpush1.bf16.msra.mxu0 0
        %1218 = vmatprep.subr.bf16.mxu0 0
        %1219 = vmatpush1.bf16.msra.mxu0 0
        %1220 = vmatprep.subr.bf16.mxu0 0
        %1221 = vmatpush1.bf16.msra.mxu0 0
        %1222 = vmatprep.subr.bf16.mxu0 0
        %1223 = vmatpush1.bf16.msra.mxu0 0
        %1224 = vmatprep.subr.bf16.mxu0 0
        %1225 = vmatpush1.bf16.msra.mxu0 0
        %1226 = vmatprep.subr.bf16.mxu0 0
        %1227 = vmatpush1.bf16.msra.mxu0 0
        %1228 = vmatprep.subr.bf16.mxu0 0
        %1229 = vmatpush1.bf16.msra.mxu0 0
        %1230 = vmatprep.subr.bf16.mxu0 0
        %1231 = vmatpush1.bf16.msra.mxu0 0
        %1232 = vmatprep.subr.bf16.mxu0 0
        %1233 = vmatpush1.bf16.msra.mxu0 0
        %1234 = vmatprep.subr.bf16.mxu0 0
        %1235 = vmatpush1.bf16.msra.mxu0 0
        %1236 = vmatprep.subr.bf16.mxu0 0
        %1237 = vmatpush1.bf16.msra.mxu0 0
        %1238 = vmatprep.subr.bf16.mxu0 0
        %1239 = vmatpush1.bf16.msra.mxu0 0
        %1240 = vmatprep.subr.bf16.mxu0 0
        %1241 = vmatpush1.bf16.msra.mxu0 0
        %1242 = vmatprep.mubr.bf16.mxu0 0
        %1243 = vmatmul.mubr.bf16.gmra.mrb[0].mxu0 %v1208
        %v1244 = vpop.f32.mrb[0].mxu0
        %v1245 = vadd.f32 0.0, %v1244
        %v1246 = vpop.f32.mrb[0].mxu0
        %v1247 = vpop.f32.mrb[0].mxu0
        %v1248 = vadd.f32 0.0, %v1247
        %v1249 = vpop.f32.mrb[0].mxu0
        %1250 = vdwg.mxu0
        %v1251 = vpack.c.bf16 %v1248, %v1245
        %s1252 = scalar_lea.vmem [#allocation8], 64
        %v1253 = vld [vmem:[%s1252] sm:$0xf]
        %v1254 = vld [vmem:[%s1252 + $0x4] sm:$0xf]
        %v1255 = vld [vmem:[%s1252 + $0x8] sm:$0xf]
        %v1256 = vld [vmem:[%s1252 + $0xc] sm:$0xf]
        %v1257 = vld [vmem:[%s1252 + $0x10] sm:$0xf]
        %v1258 = vld [vmem:[%s1252 + $0x14] sm:$0xf]
        %v1259 = vld [vmem:[%s1252 + $0x18] sm:$0xf]
        %v1260 = vld [vmem:[%s1252 + $0x1c] sm:$0xf]
        %v1269 = vunpack.c.l.b16 %v1253
        %v1270 = vunpack.c.l.b16 %v1254
        %v1271 = vunpack.c.l.b16 %v1255
        %v1272 = vunpack.c.l.b16 %v1256
        %v1273 = vunpack.c.l.b16 %v1257
        %v1274 = vunpack.c.l.b16 %v1258
        %v1275 = vunpack.c.l.b16 %v1259
        %v1276 = vunpack.c.l.b16 %v1260
        %v1277 = vpack.c.b16 %v1270, %v1269
        %v1278 = vpack.c.b16 %v1272, %v1271
        %v1279 = vpack.c.b16 %v1274, %v1273
        %v1280 = vpack.c.b16 %v1276, %v1275
        %v1286 = vsel %vm1020, %v1251, 0
        %1288 = vmatprep.subr.bf16.mxu0 0
        %1289 = vmatpush1.bf16.msra.mxu0 %v1277
        %1290 = vmatprep.subr.bf16.mxu0 0
        %1291 = vmatpush1.bf16.msra.mxu0 %v1278
        %1292 = vmatprep.subr.bf16.mxu0 0
        %1293 = vmatpush1.bf16.msra.mxu0 %v1279
        %1294 = vmatprep.subr.bf16.mxu0 0
        %1295 = vmatpush1.bf16.msra.mxu0 %v1280
        %1296 = vmatprep.subr.bf16.mxu0 0
        %1297 = vmatpush1.bf16.msra.mxu0 0
        %1298 = vmatprep.subr.bf16.mxu0 0
        %1299 = vmatpush1.bf16.msra.mxu0 0
        %1300 = vmatprep.subr.bf16.mxu0 0
        %1301 = vmatpush1.bf16.msra.mxu0 0
        %1302 = vmatprep.subr.bf16.mxu0 0
        %1303 = vmatpush1.bf16.msra.mxu0 0
        %1304 = vmatprep.subr.bf16.mxu0 0
        %1305 = vmatpush1.bf16.msra.mxu0 0
        %1306 = vmatprep.subr.bf16.mxu0 0
        %1307 = vmatpush1.bf16.msra.mxu0 0
        %1308 = vmatprep.subr.bf16.mxu0 0
        %1309 = vmatpush1.bf16.msra.mxu0 0
        %1310 = vmatprep.subr.bf16.mxu0 0
        %1311 = vmatpush1.bf16.msra.mxu0 0
        %1312 = vmatprep.subr.bf16.mxu0 0
        %1313 = vmatpush1.bf16.msra.mxu0 0
        %1314 = vmatprep.subr.bf16.mxu0 0
        %1315 = vmatpush1.bf16.msra.mxu0 0
        %1316 = vmatprep.subr.bf16.mxu0 0
        %1317 = vmatpush1.bf16.msra.mxu0 0
        %1318 = vmatprep.subr.bf16.mxu0 0
        %1319 = vmatpush1.bf16.msra.mxu0 0
        %1320 = vmatprep.mubr.bf16.mxu0 0
        %1321 = vmatmul.mubr.bf16.gmra.mrb[0].mxu0 %v1286
        %v1322 = vpop.f32.mrb[0].mxu0
        %v1323 = vadd.f32 0.0, %v1322
        %v1324 = vpop.f32.mrb[0].mxu0
        %v1325 = vpop.f32.mrb[0].mxu0
        %v1326 = vadd.f32 0.0, %v1325
        %v1327 = vpop.f32.mrb[0].mxu0
        %1328 = vdwg.mxu0
        %v1329 = vadd.f32 %v1197, %v1323
        %v1330 = vadd.f32 %v1198, %v1326
        %v1331 = vld [vmem:[%s6] sm:$0x1]
        %v1333 = vlaneseq
        %v1334 = vshrl.u32 %v1333, 7
        %v1335 = vsub.s32 0, %v1334
        %v1336 = vrot.slane %v1331, %v1335
        %v1338 = vadd.f32 %v1329, %v1336
        %v1339 = vadd.f32 %v1330, %v1336
        %v1340 = vmax.f32 %v1338, 0.0
        %v1341 = vmax.f32 %v1339, 0.0
        %v1342 = vpack.c.bf16 %v1341, %v1340
        %s1343 = scalar_lea.vmem [#allocation11], 64
        %v1344 = vld [vmem:[%s1343] sm:$0xf]
        %v1345 = vld [vmem:[%s1343 + $0x4] sm:$0xf]
        %v1346 = vld [vmem:[%s1343 + $0x8] sm:$0xf]
        %v1347 = vld [vmem:[%s1343 + $0xc] sm:$0xf]
        %v1348 = vld [vmem:[%s1343 + $0x10] sm:$0xf]
        %v1349 = vld [vmem:[%s1343 + $0x14] sm:$0xf]
        %v1350 = vld [vmem:[%s1343 + $0x18] sm:$0xf]
        %v1351 = vld [vmem:[%s1343 + $0x1c] sm:$0xf]
        %v1352 = vld [vmem:[%s1343 + $0x20] sm:$0xf]
        %v1353 = vld [vmem:[%s1343 + $0x24] sm:$0xf]
        %v1354 = vld [vmem:[%s1343 + $0x28] sm:$0xf]
        %v1355 = vld [vmem:[%s1343 + $0x2c] sm:$0xf]
        %v1356 = vld [vmem:[%s1343 + $0x30] sm:$0xf]
        %v1357 = vld [vmem:[%s1343 + $0x34] sm:$0xf]
        %v1358 = vld [vmem:[%s1343 + $0x38] sm:$0xf]
        %v1359 = vld [vmem:[%s1343 + $0x3c] sm:$0xf]
        %1360 = vmatprep.subr.bf16.mxu0 0
        %1361 = vmatpush1.bf16.msra.mxu0 %v1342
        %1362 = vmatprep.subr.bf16.mxu0 0
        %1363 = vmatpush1.bf16.msra.mxu0 0
        %1364 = vmatprep.subr.bf16.mxu0 0
        %1365 = vmatpush1.bf16.msra.mxu0 0
        %1366 = vmatprep.subr.bf16.mxu0 0
        %1367 = vmatpush1.bf16.msra.mxu0 0
        %1368 = vmatprep.subr.bf16.mxu0 0
        %1369 = vmatpush1.bf16.msra.mxu0 0
        %1370 = vmatprep.subr.bf16.mxu0 0
        %1371 = vmatpush1.bf16.msra.mxu0 0
        %1372 = vmatprep.subr.bf16.mxu0 0
        %1373 = vmatpush1.bf16.msra.mxu0 0
        %1374 = vmatprep.subr.bf16.mxu0 0
        %1375 = vmatpush1.bf16.msra.mxu0 0
        %1376 = vmatprep.subr.bf16.mxu0 0
        %1377 = vmatpush1.bf16.msra.mxu0 0
        %1378 = vmatprep.subr.bf16.mxu0 0
        %1379 = vmatpush1.bf16.msra.mxu0 0
        %1380 = vmatprep.subr.bf16.mxu0 0
        %1381 = vmatpush1.bf16.msra.mxu0 0
        %1382 = vmatprep.subr.bf16.mxu0 0
        %1383 = vmatpush1.bf16.msra.mxu0 0
        %1384 = vmatprep.subr.bf16.mxu0 0
        %1385 = vmatpush1.bf16.msra.mxu0 0
        %1386 = vmatprep.subr.bf16.mxu0 0
        %1387 = vmatpush1.bf16.msra.mxu0 0
        %1388 = vmatprep.subr.bf16.mxu0 0
        %1389 = vmatpush1.bf16.msra.mxu0 0
        %1390 = vmatprep.subr.bf16.mxu0 0
        %1391 = vmatpush1.bf16.msra.mxu0 0
        %1392 = vmatprep.mubr.bf16.mxu0 0
        %1393 = vmatmul.mubr.bf16.gmra.mrb[0].mxu0 %v532
        %v1394 = vpop.f32.mrb[0].mxu0
        %v1395 = vadd.f32 0.0, %v1394
        %v1396 = vpop.f32.mrb[0].mxu0
        %v1397 = vpop.f32.mrb[0].mxu0
        %v1398 = vadd.f32 0.0, %v1397
        %v1399 = vpop.f32.mrb[0].mxu0
        %1400 = vdwg.mxu0
        %v1401 = vpack.c.bf16 %v1398, %v1395
        %v1402 = vld [vmem:[#allocation11] sm:$0xf]
        %v1403 = vld [vmem:[#allocation11 + $0x4] sm:$0xf]
        %v1404 = vld [vmem:[#allocation11 + $0x8] sm:$0xf]
        %v1405 = vld [vmem:[#allocation11 + $0xc] sm:$0xf]
        %v1406 = vld [vmem:[#allocation11 + $0x10] sm:$0xf]
        %v1407 = vld [vmem:[#allocation11 + $0x14] sm:$0xf]
        %v1408 = vld [vmem:[#allocation11 + $0x18] sm:$0xf]
        %v1409 = vld [vmem:[#allocation11 + $0x1c] sm:$0xf]
        %v1410 = vld [vmem:[#allocation11 + $0x20] sm:$0xf]
        %v1411 = vld [vmem:[#allocation11 + $0x24] sm:$0xf]
        %v1412 = vld [vmem:[#allocation11 + $0x28] sm:$0xf]
        %v1413 = vld [vmem:[#allocation11 + $0x2c] sm:$0xf]
        %v1414 = vld [vmem:[#allocation11 + $0x30] sm:$0xf]
        %v1415 = vld [vmem:[#allocation11 + $0x34] sm:$0xf]
        %v1416 = vld [vmem:[#allocation11 + $0x38] sm:$0xf]
        %v1417 = vld [vmem:[#allocation11 + $0x3c] sm:$0xf]
        %v1434 = vunpack.c.l.b16 %v1402
        %v1435 = vunpack.c.l.b16 %v1403
        %v1436 = vunpack.c.l.b16 %v1404
        %v1437 = vunpack.c.l.b16 %v1405
        %v1438 = vunpack.c.l.b16 %v1406
        %v1439 = vunpack.c.l.b16 %v1407
        %v1440 = vunpack.c.l.b16 %v1408
        %v1441 = vunpack.c.l.b16 %v1409
        %v1442 = vunpack.c.l.b16 %v1410
        %v1443 = vunpack.c.l.b16 %v1411
        %v1444 = vunpack.c.l.b16 %v1412
        %v1445 = vunpack.c.l.b16 %v1413
        %v1446 = vunpack.c.l.b16 %v1414
        %v1447 = vunpack.c.l.b16 %v1415
        %v1448 = vunpack.c.l.b16 %v1416
        %v1449 = vunpack.c.l.b16 %v1417
        %v1450 = vpack.c.b16 %v1435, %v1434
        %v1451 = vpack.c.b16 %v1437, %v1436
        %v1452 = vpack.c.b16 %v1439, %v1438
        %v1453 = vpack.c.b16 %v1441, %v1440
        %v1454 = vpack.c.b16 %v1443, %v1442
        %v1455 = vpack.c.b16 %v1445, %v1444
        %v1456 = vpack.c.b16 %v1447, %v1446
        %v1457 = vpack.c.b16 %v1449, %v1448
        %1466 = vmatprep.subr.bf16.mxu0 0
        %1467 = vmatpush1.bf16.msra.mxu0 %v1450
        %1468 = vmatprep.subr.bf16.mxu0 0
        %1469 = vmatpush1.bf16.msra.mxu0 %v1451
        %1470 = vmatprep.subr.bf16.mxu0 0
        %1471 = vmatpush1.bf16.msra.mxu0 %v1452
        %1472 = vmatprep.subr.bf16.mxu0 0
        %1473 = vmatpush1.bf16.msra.mxu0 %v1453
        %1474 = vmatprep.subr.bf16.mxu0 0
        %1475 = vmatpush1.bf16.msra.mxu0 %v1454
        %1476 = vmatprep.subr.bf16.mxu0 0
        %1477 = vmatpush1.bf16.msra.mxu0 %v1455
        %1478 = vmatprep.subr.bf16.mxu0 0
        %1479 = vmatpush1.bf16.msra.mxu0 %v1456
        %1480 = vmatprep.subr.bf16.mxu0 0
        %1481 = vmatpush1.bf16.msra.mxu0 %v1457
        %1482 = vmatprep.subr.bf16.mxu0 0
        %1483 = vmatpush1.bf16.msra.mxu0 0
        %1484 = vmatprep.subr.bf16.mxu0 0
        %1485 = vmatpush1.bf16.msra.mxu0 0
        %1486 = vmatprep.subr.bf16.mxu0 0
        %1487 = vmatpush1.bf16.msra.mxu0 0
        %1488 = vmatprep.subr.bf16.mxu0 0
        %1489 = vmatpush1.bf16.msra.mxu0 0
        %1490 = vmatprep.subr.bf16.mxu0 0
        %1491 = vmatpush1.bf16.msra.mxu0 0
        %1492 = vmatprep.subr.bf16.mxu0 0
        %1493 = vmatpush1.bf16.msra.mxu0 0
        %1494 = vmatprep.subr.bf16.mxu0 0
        %1495 = vmatpush1.bf16.msra.mxu0 0
        %1496 = vmatprep.subr.bf16.mxu0 0
        %1497 = vmatpush1.bf16.msra.mxu0 0
        %1498 = vmatprep.mubr.bf16.mxu0 0
        %1499 = vmatmul.mubr.bf16.gmra.mrb[0].mxu0 %v1401
        %v1500 = vpop.f32.mrb[0].mxu0
        %v1501 = vadd.f32 0.0, %v1500
        %v1502 = vpop.f32.mrb[0].mxu0
        %v1503 = vpop.f32.mrb[0].mxu0
        %v1504 = vadd.f32 0.0, %v1503
        %v1505 = vpop.f32.mrb[0].mxu0
        %1506 = vdwg.mxu0
        %v1523 = vunpack.c.l.b16 %v1344
        %v1524 = vunpack.c.l.b16 %v1345
        %v1525 = vunpack.c.l.b16 %v1346
        %v1526 = vunpack.c.l.b16 %v1347
        %v1527 = vunpack.c.l.b16 %v1348
        %v1528 = vunpack.c.l.b16 %v1349
        %v1529 = vunpack.c.l.b16 %v1350
        %v1530 = vunpack.c.l.b16 %v1351
        %v1531 = vunpack.c.l.b16 %v1352
        %v1532 = vunpack.c.l.b16 %v1353
        %v1533 = vunpack.c.l.b16 %v1354
        %v1534 = vunpack.c.l.b16 %v1355
        %v1535 = vunpack.c.l.b16 %v1356
        %v1536 = vunpack.c.l.b16 %v1357
        %v1537 = vunpack.c.l.b16 %v1358
        %v1538 = vunpack.c.l.b16 %v1359
        %v1539 = vpack.c.b16 %v1524, %v1523
        %v1540 = vpack.c.b16 %v1526, %v1525
        %v1541 = vpack.c.b16 %v1528, %v1527
        %v1542 = vpack.c.b16 %v1530, %v1529
        %v1543 = vpack.c.b16 %v1532, %v1531
        %v1544 = vpack.c.b16 %v1534, %v1533
        %v1545 = vpack.c.b16 %v1536, %v1535
        %v1546 = vpack.c.b16 %v1538, %v1537
        %1555 = vmatprep.subr.bf16.mxu0 0
        %1556 = vmatpush1.bf16.msra.mxu0 %v1539
        %1557 = vmatprep.subr.bf16.mxu0 0
        %1558 = vmatpush1.bf16.msra.mxu0 %v1540
        %1559 = vmatprep.subr.bf16.mxu0 0
        %1560 = vmatpush1.bf16.msra.mxu0 %v1541
        %1561 = vmatprep.subr.bf16.mxu0 0
        %1562 = vmatpush1.bf16.msra.mxu0 %v1542
        %1563 = vmatprep.subr.bf16.mxu0 0
        %1564 = vmatpush1.bf16.msra.mxu0 %v1543
        %1565 = vmatprep.subr.bf16.mxu0 0
        %1566 = vmatpush1.bf16.msra.mxu0 %v1544
        %1567 = vmatprep.subr.bf16.mxu0 0
        %1568 = vmatpush1.bf16.msra.mxu0 %v1545
        %1569 = vmatprep.subr.bf16.mxu0 0
        %1570 = vmatpush1.bf16.msra.mxu0 %v1546
        %1571 = vmatprep.subr.bf16.mxu0 0
        %1572 = vmatpush1.bf16.msra.mxu0 0
        %1573 = vmatprep.subr.bf16.mxu0 0
        %1574 = vmatpush1.bf16.msra.mxu0 0
        %1575 = vmatprep.subr.bf16.mxu0 0
        %1576 = vmatpush1.bf16.msra.mxu0 0
        %1577 = vmatprep.subr.bf16.mxu0 0
        %1578 = vmatpush1.bf16.msra.mxu0 0
        %1579 = vmatprep.subr.bf16.mxu0 0
        %1580 = vmatpush1.bf16.msra.mxu0 0
        %1581 = vmatprep.subr.bf16.mxu0 0
        %1582 = vmatpush1.bf16.msra.mxu0 0
        %1583 = vmatprep.subr.bf16.mxu0 0
        %1584 = vmatpush1.bf16.msra.mxu0 0
        %1585 = vmatprep.subr.bf16.mxu0 0
        %1586 = vmatpush1.bf16.msra.mxu0 0
        %1587 = vmatprep.mubr.bf16.mxu0 0
        %1588 = vmatmul.mubr.bf16.gmra.mrb[0].mxu0 %v1342
        %v1589 = vpop.f32.mrb[0].mxu0
        %v1590 = vadd.f32 %v1501, %v1589
        %v1591 = vpop.f32.mrb[0].mxu0
        %v1592 = vpop.f32.mrb[0].mxu0
        %v1593 = vadd.f32 %v1504, %v1592
        %v1594 = vpop.f32.mrb[0].mxu0
        %1595 = vdwg.mxu0
        %1596 = vmatprep.subr.bf16.mxu0 0
        %1597 = vmatpush1.bf16.msra.mxu0 %v1342
        %1598 = vmatprep.subr.bf16.mxu0 0
        %1599 = vmatpush1.bf16.msra.mxu0 0
        %1600 = vmatprep.subr.bf16.mxu0 0
        %1601 = vmatpush1.bf16.msra.mxu0 0
        %1602 = vmatprep.subr.bf16.mxu0 0
        %1603 = vmatpush1.bf16.msra.mxu0 0
        %1604 = vmatprep.subr.bf16.mxu0 0
        %1605 = vmatpush1.bf16.msra.mxu0 0
        %1606 = vmatprep.subr.bf16.mxu0 0
        %1607 = vmatpush1.bf16.msra.mxu0 0
        %1608 = vmatprep.subr.bf16.mxu0 0
        %1609 = vmatpush1.bf16.msra.mxu0 0
        %1610 = vmatprep.subr.bf16.mxu0 0
        %1611 = vmatpush1.bf16.msra.mxu0 0
        %1612 = vmatprep.subr.bf16.mxu0 0
        %1613 = vmatpush1.bf16.msra.mxu0 0
        %1614 = vmatprep.subr.bf16.mxu0 0
        %1615 = vmatpush1.bf16.msra.mxu0 0
        %1616 = vmatprep.subr.bf16.mxu0 0
        %1617 = vmatpush1.bf16.msra.mxu0 0
        %1618 = vmatprep.subr.bf16.mxu0 0
        %1619 = vmatpush1.bf16.msra.mxu0 0
        %1620 = vmatprep.subr.bf16.mxu0 0
        %1621 = vmatpush1.bf16.msra.mxu0 0
        %1622 = vmatprep.subr.bf16.mxu0 0
        %1623 = vmatpush1.bf16.msra.mxu0 0
        %1624 = vmatprep.subr.bf16.mxu0 0
        %1625 = vmatpush1.bf16.msra.mxu0 0
        %1626 = vmatprep.subr.bf16.mxu0 0
        %1627 = vmatpush1.bf16.msra.mxu0 0
        %1628 = vmatprep.mubr.bf16.mxu0 0
        %1629 = vmatmul.mubr.bf16.gmra.mrb[0].mxu0 %v779
        %v1630 = vpop.f32.mrb[0].mxu0
        %v1631 = vadd.f32 0.0, %v1630
        %v1632 = vpop.f32.mrb[0].mxu0
        %v1633 = vpop.f32.mrb[0].mxu0
        %v1634 = vadd.f32 0.0, %v1633
        %v1635 = vpop.f32.mrb[0].mxu0
        %1636 = vdwg.mxu0
        %v1637 = vpack.c.bf16 %v1634, %v1631
        %s1638 = scalar_lea.vmem [#allocation11], 128
        %v1639 = vld [vmem:[%s1638] sm:$0xf]
        %v1640 = vld [vmem:[%s1638 + $0x4] sm:$0xf]
        %v1641 = vld [vmem:[%s1638 + $0x8] sm:$0xf]
        %v1642 = vld [vmem:[%s1638 + $0xc] sm:$0xf]
        %v1643 = vld [vmem:[%s1638 + $0x10] sm:$0xf]
        %v1644 = vld [vmem:[%s1638 + $0x14] sm:$0xf]
        %v1645 = vld [vmem:[%s1638 + $0x18] sm:$0xf]
        %v1646 = vld [vmem:[%s1638 + $0x1c] sm:$0xf]
        %v1647 = vld [vmem:[%s1638 + $0x20] sm:$0xf]
        %v1648 = vld [vmem:[%s1638 + $0x24] sm:$0xf]
        %v1649 = vld [vmem:[%s1638 + $0x28] sm:$0xf]
        %v1650 = vld [vmem:[%s1638 + $0x2c] sm:$0xf]
        %v1651 = vld [vmem:[%s1638 + $0x30] sm:$0xf]
        %v1652 = vld [vmem:[%s1638 + $0x34] sm:$0xf]
        %v1653 = vld [vmem:[%s1638 + $0x38] sm:$0xf]
        %v1654 = vld [vmem:[%s1638 + $0x3c] sm:$0xf]
        %v1671 = vunpack.c.l.b16 %v1639
        %v1672 = vunpack.c.l.b16 %v1640
        %v1673 = vunpack.c.l.b16 %v1641
        %v1674 = vunpack.c.l.b16 %v1642
        %v1675 = vunpack.c.l.b16 %v1643
        %v1676 = vunpack.c.l.b16 %v1644
        %v1677 = vunpack.c.l.b16 %v1645
        %v1678 = vunpack.c.l.b16 %v1646
        %v1679 = vunpack.c.l.b16 %v1647
        %v1680 = vunpack.c.l.b16 %v1648
        %v1681 = vunpack.c.l.b16 %v1649
        %v1682 = vunpack.c.l.b16 %v1650
        %v1683 = vunpack.c.l.b16 %v1651
        %v1684 = vunpack.c.l.b16 %v1652
        %v1685 = vunpack.c.l.b16 %v1653
        %v1686 = vunpack.c.l.b16 %v1654
        %v1687 = vpack.c.b16 %v1672, %v1671
        %v1688 = vpack.c.b16 %v1674, %v1673
        %v1689 = vpack.c.b16 %v1676, %v1675
        %v1690 = vpack.c.b16 %v1678, %v1677
        %v1691 = vpack.c.b16 %v1680, %v1679
        %v1692 = vpack.c.b16 %v1682, %v1681
        %v1693 = vpack.c.b16 %v1684, %v1683
        %v1694 = vpack.c.b16 %v1686, %v1685
        %1703 = vmatprep.subr.bf16.mxu0 0
        %1704 = vmatpush1.bf16.msra.mxu0 %v1687
        %1705 = vmatprep.subr.bf16.mxu0 0
        %1706 = vmatpush1.bf16.msra.mxu0 %v1688
        %1707 = vmatprep.subr.bf16.mxu0 0
        %1708 = vmatpush1.bf16.msra.mxu0 %v1689
        %1709 = vmatprep.subr.bf16.mxu0 0
        %1710 = vmatpush1.bf16.msra.mxu0 %v1690
        %1711 = vmatprep.subr.bf16.mxu0 0
        %1712 = vmatpush1.bf16.msra.mxu0 %v1691
        %1713 = vmatprep.subr.bf16.mxu0 0
        %1714 = vmatpush1.bf16.msra.mxu0 %v1692
        %1715 = vmatprep.subr.bf16.mxu0 0
        %1716 = vmatpush1.bf16.msra.mxu0 %v1693
        %1717 = vmatprep.subr.bf16.mxu0 0
        %1718 = vmatpush1.bf16.msra.mxu0 %v1694
        %1719 = vmatprep.subr.bf16.mxu0 0
        %1720 = vmatpush1.bf16.msra.mxu0 0
        %1721 = vmatprep.subr.bf16.mxu0 0
        %1722 = vmatpush1.bf16.msra.mxu0 0
        %1723 = vmatprep.subr.bf16.mxu0 0
        %1724 = vmatpush1.bf16.msra.mxu0 0
        %1725 = vmatprep.subr.bf16.mxu0 0
        %1726 = vmatpush1.bf16.msra.mxu0 0
        %1727 = vmatprep.subr.bf16.mxu0 0
        %1728 = vmatpush1.bf16.msra.mxu0 0
        %1729 = vmatprep.subr.bf16.mxu0 0
        %1730 = vmatpush1.bf16.msra.mxu0 0
        %1731 = vmatprep.subr.bf16.mxu0 0
        %1732 = vmatpush1.bf16.msra.mxu0 0
        %1733 = vmatprep.subr.bf16.mxu0 0
        %1734 = vmatpush1.bf16.msra.mxu0 0
        %1735 = vmatprep.mubr.bf16.mxu0 0
        %1736 = vmatmul.mubr.bf16.gmra.mrb[0].mxu0 %v1637
        %v1737 = vpop.f32.mrb[0].mxu0
        %v1738 = vadd.f32 0.0, %v1737
        %v1739 = vpop.f32.mrb[0].mxu0
        %v1740 = vpop.f32.mrb[0].mxu0
        %v1741 = vadd.f32 0.0, %v1740
        %v1742 = vpop.f32.mrb[0].mxu0
        %1743 = vdwg.mxu0
        %v1744 = vadd.f32 %v1590, %v1738
        %v1745 = vadd.f32 %v1593, %v1741
        %v1746 = vld [vmem:[%s8] sm:$0x1]
        %v1748 = vlaneseq
        %v1749 = vshrl.u32 %v1748, 7
        %v1750 = vsub.s32 0, %v1749
        %v1751 = vrot.slane %v1746, %v1750
        %v1753 = vadd.f32 %v1744, %v1751
        %v1754 = vadd.f32 %v1745, %v1751
        %v1755 = vadd.f32 %v1753, %v1340
        %v1756 = vadd.f32 %v1754, %v1341
        %v1757 = vmax.f32 %v1755, 0.0
        %v1758 = vmax.f32 %v1756, 0.0
        %v1759 = vpack.c.bf16 %v1758, %v1757
        %v1760 = vld [vmem:[%s9] sm:$0xf]
        %v1761 = vld [vmem:[%s9 + $0x4] sm:$0xf]
        %v1762 = vld [vmem:[%s9 + $0x8] sm:$0xf]
        %v1763 = vld [vmem:[%s9 + $0xc] sm:$0xf]
        %v1764 = vld [vmem:[%s9 + $0x10] sm:$0xf]
        %v1765 = vld [vmem:[%s9 + $0x14] sm:$0xf]
        %v1766 = vld [vmem:[%s9 + $0x18] sm:$0xf]
        %v1767 = vld [vmem:[%s9 + $0x1c] sm:$0xf]
        %v1768 = vld [vmem:[%s9 + $0x20] sm:$0xf]
        %v1769 = vld [vmem:[%s9 + $0x24] sm:$0xf]
        %v1770 = vld [vmem:[%s9 + $0x28] sm:$0xf]
        %v1771 = vld [vmem:[%s9 + $0x2c] sm:$0xf]
        %v1772 = vld [vmem:[%s9 + $0x30] sm:$0xf]
        %v1773 = vld [vmem:[%s9 + $0x34] sm:$0xf]
        %v1774 = vld [vmem:[%s9 + $0x38] sm:$0xf]
        %v1775 = vld [vmem:[%s9 + $0x3c] sm:$0xf]
        %v1776 = vld [vmem:[%s10] sm:$0x1]
        %v1778 = vlaneseq
        %v1779 = vshrl.u32 %v1778, 7
        %v1780 = vsub.s32 0, %v1779
        %v1781 = vrot.slane %v1776, %v1780
        %v1799 = vunpack.c.l.b16 %v1760
        %v1800 = vunpack.c.l.b16 %v1761
        %v1801 = vunpack.c.l.b16 %v1762
        %v1802 = vunpack.c.l.b16 %v1763
        %v1803 = vunpack.c.l.b16 %v1764
        %v1804 = vunpack.c.l.b16 %v1765
        %v1805 = vunpack.c.l.b16 %v1766
        %v1806 = vunpack.c.l.b16 %v1767
        %v1807 = vunpack.c.l.b16 %v1768
        %v1808 = vunpack.c.l.b16 %v1769
        %v1809 = vunpack.c.l.b16 %v1770
        %v1810 = vunpack.c.l.b16 %v1771
        %v1811 = vunpack.c.l.b16 %v1772
        %v1812 = vunpack.c.l.b16 %v1773
        %v1813 = vunpack.c.l.b16 %v1774
        %v1814 = vunpack.c.l.b16 %v1775
        %v1815 = vpack.c.b16 %v1800, %v1799
        %v1816 = vpack.c.b16 %v1802, %v1801
        %v1817 = vpack.c.b16 %v1804, %v1803
        %v1818 = vpack.c.b16 %v1806, %v1805
        %v1819 = vpack.c.b16 %v1808, %v1807
        %v1820 = vpack.c.b16 %v1810, %v1809
        %v1821 = vpack.c.b16 %v1812, %v1811
        %v1822 = vpack.c.b16 %v1814, %v1813
        %1831 = vmatprep.subr.bf16.mxu0 0
        %1832 = vmatpush1.bf16.msra.mxu0 %v1815
        %1833 = vmatprep.subr.bf16.mxu0 0
        %1834 = vmatpush1.bf16.msra.mxu0 %v1816
        %1835 = vmatprep.subr.bf16.mxu0 0
        %1836 = vmatpush1.bf16.msra.mxu0 %v1817
        %1837 = vmatprep.subr.bf16.mxu0 0
        %1838 = vmatpush1.bf16.msra.mxu0 %v1818
        %1839 = vmatprep.subr.bf16.mxu0 0
        %1840 = vmatpush1.bf16.msra.mxu0 %v1819
        %1841 = vmatprep.subr.bf16.mxu0 0
        %1842 = vmatpush1.bf16.msra.mxu0 %v1820
        %1843 = vmatprep.subr.bf16.mxu0 0
        %1844 = vmatpush1.bf16.msra.mxu0 %v1821
        %1845 = vmatprep.subr.bf16.mxu0 0
        %1846 = vmatpush1.bf16.msra.mxu0 %v1822
        %1847 = vmatprep.subr.bf16.mxu0 0
        %1848 = vmatpush1.bf16.msra.mxu0 0
        %1849 = vmatprep.subr.bf16.mxu0 0
        %1850 = vmatpush1.bf16.msra.mxu0 0
        %1851 = vmatprep.subr.bf16.mxu0 0
        %1852 = vmatpush1.bf16.msra.mxu0 0
        %1853 = vmatprep.subr.bf16.mxu0 0
        %1854 = vmatpush1.bf16.msra.mxu0 0
        %1855 = vmatprep.subr.bf16.mxu0 0
        %1856 = vmatpush1.bf16.msra.mxu0 0
        %1857 = vmatprep.subr.bf16.mxu0 0
        %1858 = vmatpush1.bf16.msra.mxu0 0
        %1859 = vmatprep.subr.bf16.mxu0 0
        %1860 = vmatpush1.bf16.msra.mxu0 0
        %1861 = vmatprep.subr.bf16.mxu0 0
        %1862 = vmatpush1.bf16.msra.mxu0 0
        %1863 = vmatprep.mubr.bf16.mxu0 0
        %1864 = vmatmul.mubr.bf16.gmra.mrb[0].mxu0 %v1759
        %v1865 = vpop.f32.mrb[0].mxu0
        %v1866 = vadd.f32 %v1781, %v1865
        %v1867 = vpop.f32.mrb[0].mxu0
        %v1868 = vpop.f32.mrb[0].mxu0
        %v1869 = vadd.f32 %v1781, %v1868
        %v1870 = vpop.f32.mrb[0].mxu0
        %1871 = vdwg.mxu0
        %v1872 = vmax.f32 %v1866, 0.0
        %v1873 = vmax.f32 %v1869, 0.0
        %1874 = vst [vmem:[%s499] sm:$0xff] %v1872
        %1875 = vst [vmem:[%s499 + $0x8] sm:$0xff] %v1873
        %s1876 = sand.u32 %s282, 1
        %s1877 = scalar_lea.sflag [#allocation4], %s1876
        %s1878 = sand.u32 %s282, 1
        %s1879 = smul.addr %s1878, 16
        %s1880 = scalar_lea.vmem [#allocation13], %s1879
        // Predicated region
        $region89: #{tpu_custom_call.1} parent=63 // pred_check
          %p1881 = pneg %p292
        $region90: #{tpu_custom_call.1} parent=63 // pred_check_branch
          %1883 = sbr.rel (%p1881) target = $region92
        $region91: #{tpu_custom_call.1} parent=63 // pred_region
          %s1885 = ssub.s32 256, 256
          %1886 = vsyncadd %s1877, %s1885
          %s1887 = smul.addr %s33, 2
          %s1888 = smul.addr %s1887, 128
          %s1889 = scalar_lea.hbm %s11, %s1888
          %s1890 = sshll.u32 %s1880, 4
          %s1891 = int_to_ptr.vmem [resolvable:$true] %s1890
          %1896 = dma.vmem_to_hbm [thread:$0]  %s1891, 256, %s1889, %s1877, 128, 128, 8
        $region92: #{tpu_custom_call.1} parent=63 // pred_fallthru
          _
      $region64: #{tpu_custom_call.1} parent=5 // pred_fallthru
        _
      %p1897 = scmp.le.s32.totalorder 2, %s28
      // Predicated region
      $region93: #{tpu_custom_call.1} parent=5 // pred_check
        %p1898 = pneg %p1897
      $region94: #{tpu_custom_call.1} parent=5 // pred_check_branch
        %1900 = sbr.rel (%p1898) target = $region96
      $region95: #{tpu_custom_call.1} parent=5 // pred_region
        %s1901 = ssub.s32 %s28, 2
        // Predicated region
        $region97: #{tpu_custom_call.1} parent=95 // pred_check
          %p1902 = pneg %p298
        $region98: #{tpu_custom_call.1} parent=95 // pred_check_branch
          %1904 = sbr.rel (%p1902) target = $region100
        $region99: #{tpu_custom_call.1} parent=95 // pred_region
          %s1905 = sand.u32 %s283, 1
          %s1906 = scalar_lea.sflag [#allocation4], %s1905
          %s1907 = sand.u32 %s283, 1
          %s1908 = smul.addr %s1907, 16
          %s1909 = scalar_lea.vmem [#allocation13], %s1908
          %1910 = dma.done %s1906, 256
        $region100: #{tpu_custom_call.1} parent=95 // pred_fallthru
          _
      $region96: #{tpu_custom_call.1} parent=5 // pred_fallthru
        _
    $region6: #{tpu_custom_call.1} parent=1 // loop_footer
      %s32 = sadd.s32 1, %s28
    $region7: #{tpu_custom_call.1} parent=1 // loop_footer_branch
      %27 = sbr.rel target = $region3
    $region8: #{tpu_custom_call.1} parent=1 // loop_exit
      _
    %1911 = vsyncpa [#allocation3], 1
    %s1912 = scalar_lea.sflag [#allocation3], 1
    %1913 = vsyncpa %s1912, 1
    %1914 = vsyncpa [#allocation6], 1
    %s1915 = scalar_lea.sflag [#allocation6], 1
    %1916 = vsyncpa %s1915, 1
    %1917 = vsyncpa [#allocation9], 1
    %1918 = vsyncpa [#allocation12], 1
    %1919 = vsyncpa [#allocation4], 1
    %s1920 = scalar_lea.sflag [#allocation4], 1
    %1921 = vsyncpa %s1920, 1

</llo_original>
